<compile_context>
chip_gen: v6e
topology: v6e:2x2x1
jax: 0.10.0
libtpu: 0.0.40
codegen_flags: <defaults>
</compile_context>

<pallas_src>
import numpy as np
import jax
import jax.numpy as jnp
from jax.experimental import pallas as pl
from jax.experimental.pallas import tpu as pltpu

# --- StereoLoss hyper-parameters (from the PyTorch module __init__) ---
EDGE_WEIGHT = 10.0        # DisparitySmoothness
BETA = 1.0                # SmoothL1Loss
SMOOTH_L1_W = 1.0
SSIM_W = 0.1
SMOOTHNESS_W = 0.1
WIN_SIZE = 5              # SSIM window
PAD = WIN_SIZE // 2
C1 = 0.01 ** 2
C2 = 0.03 ** 2


def _gaussian_1d(window_size=WIN_SIZE, sigma=1.5):
    coords = np.arange(window_size, dtype=np.float64)
    center = window_size // 2
    g = np.exp(-(coords - center) ** 2 / (2.0 * sigma ** 2))
    return g / g.sum()


_G1D = _gaussian_1d()                               # separable 1-D taps (sum to 1)
_WIN2D = np.outer(_G1D, _G1D).astype(np.float32)    # used only by the pure-JAX reference


def _round_up(x, m):
    return (x + m - 1) // m * m


def _choose_tile_rows(H, W):
    """Largest divisor of H that is a multiple of 8 and fits a ~28 MiB VMEM budget."""
    if H % 8 != 0:
        return H                                   # degenerate fallback: one tile / image
    wpad = _round_up(W + 2 * PAD, 128)
    per_row = wpad * 4 * 14 + W * 4 * 2 * 5        # live SSIM planes + double-buffered inputs
    cap = max(8, (28 * 1024 * 1024) // per_row)
    cap = min(cap, 256, H)
    best, th = 8, 8
    while th <= cap:
        if H % th == 0:
            best = th
        th += 8
    return best


def _stereo_kernel(pred_ref, targ_ref, img_ref,
                   ptop_ref, pbot_ref, ttop_ref, tbot_ref, ibot_ref,
                   out_ref, pbuf, tbuf):
    """One grid program == one (batch, row-tile).  Emits 5 partial sums."""
    t = pl.program_id(1)
    nt = pl.num_programs(1)
    first = t == 0
    last = t == nt - 1

    TH, W = pred_ref.shape[1], pred_ref.shape[2]
    HB = ptop_ref.shape[1]
    ROWS, WPAD = pbuf.shape

    pt = pred_ref[0]                      # (TH, W) rows owned by this tile
    tt = targ_ref[0]

    # ------- assemble zero-padded raw windows in a roll-friendly layout -------
    # rows [0, TH)        : owned rows
    # rows [TH, TH+2)     : bottom halo (next tile's first rows / zeros at image edge)
    # rows [ROWS-2, ROWS) : top halo    (previous tile's last rows / zeros at image edge)
    # everything else (incl. cols >= W): zeros == the logical conv zero padding
    pbuf[...] = jnp.zeros_like(pbuf)
    tbuf[...] = jnp.zeros_like(tbuf)
    pbuf[0:TH, 0:W] = pt
    tbuf[0:TH, 0:W] = tt

    zero_strip = jnp.zeros((PAD, W), jnp.float32)
    pbuf[TH:TH + PAD, 0:W] = jnp.where(last, zero_strip, pbot_ref[0, 0:PAD, :])
    tbuf[TH:TH + PAD, 0:W] = jnp.where(last, zero_strip, tbot_ref[0, 0:PAD, :])
    pbuf[ROWS - PAD:ROWS, 0:W] = jnp.where(first, zero_strip, ptop_ref[0, HB - PAD:HB, :])
    tbuf[ROWS - PAD:ROWS, 0:W] = jnp.where(first, zero_strip, ttop_ref[0, HB - PAD:HB, :])

    # ------- SmoothL1 (masked) directly on the aligned owned tile -------
    mt = (tt > 0.0).astype(jnp.float32)
    diff = jnp.abs(pt - tt) * mt
    l1_sum = jnp.sum(jnp.where(diff < BETA, (0.5 / BETA) * diff * diff, diff - 0.5 * BETA))
    mask_sum = jnp.sum(mt)

    # ------- SSIM: separable 5x5 Gaussian, all shifts on the XLU via pltpu.roll -------
    qp = pbuf[...]
    qt = tbuf[...]
    m = (qt > 0.0).astype(jnp.float32)
    x1 = qp * m                            # pred * mask, zero-padded
    x2 = qt * m                            # targ * mask, zero-padded

    g0 = float(_G1D[0])
    g1 = float(_G1D[1])
    g2 = float(_G1D[2])

    def blur1d(q, axis, size):
        # symmetric 5-tap "same" conv; +/- shifts are grouped so the result does not
        # depend on the roll direction convention; wrapped entries read zero filler.
        return (g2 * q
                + g1 * (pltpu.roll(q, 1, axis) + pltpu.roll(q, size - 1, axis))
                + g0 * (pltpu.roll(q, 2, axis) + pltpu.roll(q, size - 2, axis)))

    def conv5x5(q):
        return blur1d(blur1d(q, 0, ROWS), 1, WPAD)

    mu1 = conv5x5(x1)
    mu2 = conv5x5(x2)
    mu12 = mu1 * mu2
    musq = mu1 * mu1 + mu2 * mu2           # mu1/mu2 no longer needed past this point
    num = (2.0 * mu12 + C1) * (2.0 * (conv5x5(x1 * x2) - mu12) + C2)
    den = (musq + C1) * (conv5x5(x1 * x1) + conv5x5(x2 * x2) - musq + C2)
    ssim_map = num / den

    rows_i = jax.lax.broadcasted_iota(jnp.int32, (ROWS, WPAD), 0)
    cols_i = jax.lax.broadcasted_iota(jnp.int32, (ROWS, WPAD), 1)
    owned = (rows_i < TH) & (cols_i < W)
    ssim_sum = jnp.sum(jnp.where(owned, ssim_map, 0.0))

    # ------- edge-aware disparity smoothness -------
    img = img_ref[0]                       # (3, TH, W)
    dgx = jnp.abs(pt[:, :-1] - pt[:, 1:])
    adx = (jnp.abs(img[0, :, :-1] - img[0, :, 1:])
           + jnp.abs(img[1, :, :-1] - img[1, :, 1:])
           + jnp.abs(img[2, :, :-1] - img[2, :, 1:]))
    sx_sum = jnp.sum(dgx * jnp.exp((-EDGE_WEIGHT / 3.0) * adx))

    dgy = jnp.abs(pt[:-1, :] - pt[1:, :])
    ady = (jnp.abs(img[0, :-1, :] - img[0, 1:, :])
           + jnp.abs(img[1, :-1, :] - img[1, 1:, :])
           + jnp.abs(img[2, :-1, :] - img[2, 1:, :]))
    sy_sum = jnp.sum(dgy * jnp.exp((-EDGE_WEIGHT / 3.0) * ady))

    # y-gradient pair that crosses into the next row tile (absent on the last tile)
    dgy_b = jnp.abs(pt[TH - 1:TH, :] - pbot_ref[0, 0:1, :])
    ady_b = (jnp.abs(img[0, TH - 1:TH, :] - ibot_ref[0, 0, 0:1, :])
             + jnp.abs(img[1, TH - 1:TH, :] - ibot_ref[0, 1, 0:1, :])
             + jnp.abs(img[2, TH - 1:TH, :] - ibot_ref[0, 2, 0:1, :]))
    sy_b = jnp.sum(dgy_b * jnp.exp((-EDGE_WEIGHT / 3.0) * ady_b))
    sy_sum = sy_sum + jnp.where(last, 0.0, sy_b)

    # ------- lane-dense per-(batch, row-tile) partial-sum block -------
    lane = jax.lax.broadcasted_iota(jnp.int32, (8, 128), 1)
    vals = (l1_sum * (lane == 0).astype(jnp.float32)
            + mask_sum * (lane == 1).astype(jnp.float32)
            + ssim_sum * (lane == 2).astype(jnp.float32)
            + sx_sum * (lane == 3).astype(jnp.float32)
            + sy_sum * (lane == 4).astype(jnp.float32))
    out_ref[0, 0] = vals


def stereo_loss(output, target, left_img, tile_rows=None):
    """output/target: [B,1,H,W]; left_img: [B,3,H,W]. Returns the scalar StereoLoss."""
    pred = output[:, 0].astype(jnp.float32)     # [B, H, W]
    targ = target[:, 0].astype(jnp.float32)     # [B, H, W]
    img = left_img.astype(jnp.float32)          # [B, 3, H, W]
    B, H, W = pred.shape

    TH = _choose_tile_rows(H, W) if tile_rows is None else int(tile_rows)
    assert H % TH == 0 and (TH % 8 == 0 or TH == H), "tile_rows must divide H (multiple of 8)"
    NT = H // TH                                  # row tiles per image
    HB = 8 if (H % 8 == 0 and TH % 8 == 0) else TH   # halo fetch block rows
    RB = TH // HB                                 # HB-row blocks per tile
    NHB = H // HB                                 # HB-row blocks per image
    ROWS = _round_up(TH + 2 * PAD, 8)             # padded scratch rows (roll-friendly)
    WPAD = _round_up(W + 2 * PAD, 128)            # padded scratch lanes (roll-friendly)

    in_specs = [
        pl.BlockSpec((1, TH, W), lambda b, t: (b, t, 0)),               # pred tile
        pl.BlockSpec((1, TH, W), lambda b, t: (b, t, 0)),               # targ tile
        pl.BlockSpec((1, 3, TH, W), lambda b, t: (b, 0, t, 0)),         # img tile
        pl.BlockSpec((1, HB, W),                                        # pred top halo (clamped)
                     lambda b, t: (b, jnp.maximum(t * RB - 1, 0), 0)),
        pl.BlockSpec((1, HB, W),                                        # pred bottom halo (clamped)
                     lambda b, t: (b, jnp.minimum((t + 1) * RB, NHB - 1), 0)),
        pl.BlockSpec((1, HB, W),                                        # targ top halo (clamped)
                     lambda b, t: (b, jnp.maximum(t * RB - 1, 0), 0)),
        pl.BlockSpec((1, HB, W),                                        # targ bottom halo (clamped)
                     lambda b, t: (b, jnp.minimum((t + 1) * RB, NHB - 1), 0)),
        pl.BlockSpec((1, 3, HB, W),                                     # img next-row halo (clamped)
                     lambda b, t: (b, 0, jnp.minimum((t + 1) * RB, NHB - 1), 0)),
    ]

    partials = pl.pallas_call(
        _stereo_kernel,
        out_shape=jax.ShapeDtypeStruct((B, NT, 8, 128), jnp.float32),
        grid_spec=pltpu.PrefetchScalarGridSpec(
            num_scalar_prefetch=0,
            grid=(B, NT),
            in_specs=in_specs,
            out_specs=pl.BlockSpec((1, 1, 8, 128), lambda b, t: (b, t, 0, 0)),
            scratch_shapes=[pltpu.VMEM((ROWS, WPAD), jnp.float32),
                            pltpu.VMEM((ROWS, WPAD), jnp.float32)],
        ),
        compiler_params=pltpu.CompilerParams(
            dimension_semantics=("parallel", "parallel"),  # per-(b, tile) partials -> no serialization
            vmem_limit_bytes=48 * 1024 * 1024,             # tiles sized for ~28 MiB actual use
        ),
    )(pred, targ, img, pred, pred, targ, targ, img)

    sums = jnp.sum(partials[:, :, 0, :5], axis=(0, 1))     # one aligned slice read
    l1_sum, mask_sum, ssim_sum, sx_sum, sy_sum = (sums[i] for i in range(5))

    l1_loss = l1_sum / (mask_sum + 1e-6)
    ssim_loss = 1.0 - ssim_sum / float(B * H * W)
    smooth_loss = sx_sum / float(B * H * (W - 1)) + sy_sum / float(B * (H - 1) * W)
    return SMOOTH_L1_W * l1_loss + SSIM_W * ssim_loss + SMOOTHNESS_W * smooth_loss


# ---------------- pure-JAX reference (mirrors the PyTorch math) ----------------
def _ref_loss(output, target, left_img):
    pred = output[:, 0].astype(jnp.float32)
    targ = target[:, 0].astype(jnp.float32)
    img = left_img.astype(jnp.float32)
    B, H, W = pred.shape

    mask = (targ > 0).astype(jnp.float32)
    diff = jnp.abs(pred - targ) * mask
    valid = jnp.sum(mask) + 1e-6
    l1 = jnp.sum(jnp.where(diff < BETA, 0.5 * diff ** 2 / BETA, diff - 0.5 * BETA)) / valid

    i1 = jnp.pad(pred * mask, ((0, 0), (PAD, PAD), (PAD, PAD)))
    i2 = jnp.pad(targ * mask, ((0, 0), (PAD, PAD), (PAD, PAD)))

    def conv5(xp):
        acc = jnp.zeros((B, H, W), jnp.float32)
        for dy in range(WIN_SIZE):
            for dx in range(WIN_SIZE):
                acc = acc + float(_WIN2D[dy, dx]) * xp[:, dy:dy + H, dx:dx + W]
        return acc

    mu1, mu2 = conv5(i1), conv5(i2)
    s11 = conv5(i1 * i1) - mu1 * mu1
    s22 = conv5(i2 * i2) - mu2 * mu2
    s12 = conv5(i1 * i2) - mu1 * mu2
    ssim_map = ((2 * mu1 * mu2 + C1) * (2 * s12 + C2)) / \
               ((mu1 * mu1 + mu2 * mu2 + C1) * (s11 + s22 + C2))
    ssim_loss = 1.0 - jnp.mean(ssim_map)

    dgx = jnp.abs(pred[:, :, :-1] - pred[:, :, 1:])
    dgy = jnp.abs(pred[:, :-1, :] - pred[:, 1:, :])
    igx = jnp.mean(jnp.abs(img[:, :, :, :-1] - img[:, :, :, 1:]), 1)
    igy = jnp.mean(jnp.abs(img[:, :, :-1, :] - img[:, :, 1:, :]), 1)
    smooth = jnp.mean(dgx * jnp.exp(-EDGE_WEIGHT * igx)) + \
             jnp.mean(dgy * jnp.exp(-EDGE_WEIGHT * igy))

    return SMOOTH_L1_W * l1 + SSIM_W * ssim_loss + SMOOTHNESS_W * smooth


if __name__ == "__main__":
    B, H, W = 2, 16, 16
    key = jax.random.PRNGKey(0)
    k1, k2, k3, k4 = jax.random.split(key, 4)

    output = jax.random.uniform(k1, (B, 1, H, W), jnp.float32, 0.0, 4.0)
    # target with some invalid (<= 0) pixels so the mask is non-trivial
    target = jax.random.uniform(k2, (B, 1, H, W), jnp.float32, 0.0, 4.0)
    drop = jax.random.uniform(k3, (B, 1, H, W)) < 0.3
    target = jnp.where(drop, 0.0, target)
    left_img = jax.random.uniform(k4, (B, 3, H, W), jnp.float32, 0.0, 1.0)

    # tile_rows=8 exercises the multi-row-tile path (2 tiles per image) at this small H.
    loss = jax.block_until_ready(stereo_loss(output, target, left_img, tile_rows=8))
    ref = jax.block_until_ready(_ref_loss(output, target, left_img))
    np.testing.assert_allclose(np.asarray(loss), np.asarray(ref), rtol=1e-4, atol=1e-5)

    print("KERNEL_OK")
</pallas_src>

<mosaic_0001>
module attributes {stable_mosaic.version = 11 : i64} {
  func.func @_stereo_kernel(%arg0: i32, %arg1: i32, %arg2: memref<1x8x16xf32, #tpu.memory_space<vmem>>, %arg3: memref<1x8x16xf32, #tpu.memory_space<vmem>>, %arg4: memref<1x3x8x16xf32, #tpu.memory_space<vmem>>, %arg5: memref<1x8x16xf32, #tpu.memory_space<vmem>>, %arg6: memref<1x8x16xf32, #tpu.memory_space<vmem>>, %arg7: memref<1x8x16xf32, #tpu.memory_space<vmem>>, %arg8: memref<1x8x16xf32, #tpu.memory_space<vmem>>, %arg9: memref<1x3x8x16xf32, #tpu.memory_space<vmem>>, %arg10: memref<1x1x8x128xf32, #tpu.memory_space<vmem>>, %arg11: memref<16x128xf32, #tpu.memory_space<vmem>>, %arg12: memref<16x128xf32, #tpu.memory_space<vmem>>) attributes {dimension_semantics = [#tpu.dimension_semantics<parallel>, #tpu.dimension_semantics<parallel>], iteration_bounds = array<i64: 2, 2>, scalar_prefetch = 0 : i64, scratch_operands = 2 : i64, tpu.core_type = #tpu.core_type<tc>, window_params = [{transform_indices = @transform_0, window_bounds = array<i64: 1, 8, 16>}, {transform_indices = @transform_1, window_bounds = array<i64: 1, 8, 16>}, {transform_indices = @transform_2, window_bounds = array<i64: 1, 3, 8, 16>}, {transform_indices = @transform_3, window_bounds = array<i64: 1, 8, 16>}, {transform_indices = @transform_4, window_bounds = array<i64: 1, 8, 16>}, {transform_indices = @transform_5, window_bounds = array<i64: 1, 8, 16>}, {transform_indices = @transform_6, window_bounds = array<i64: 1, 8, 16>}, {transform_indices = @transform_7, window_bounds = array<i64: 1, 3, 8, 16>}, {transform_indices = @transform_8, window_bounds = array<i64: 1, 1, 8, 128>}]} {
    %c0_i32 = arith.constant 0 : i32
    %0 = arith.cmpi eq, %arg1, %c0_i32 : i32
    %c1_i32 = arith.constant 1 : i32
    %1 = arith.cmpi eq, %arg1, %c1_i32 : i32
    %c0 = arith.constant 0 : index
    %c0_0 = arith.constant 0 : index
    %c0_1 = arith.constant 0 : index
    %2 = vector.load %arg2[%c0, %c0_0, %c0_1] : memref<1x8x16xf32, #tpu.memory_space<vmem>>, vector<1x8x16xf32>
    %3 = vector.shape_cast %2 : vector<1x8x16xf32> to vector<8x16xf32>
    %c0_2 = arith.constant 0 : index
    %c0_3 = arith.constant 0 : index
    %c0_4 = arith.constant 0 : index
    %4 = vector.load %arg3[%c0_2, %c0_3, %c0_4] : memref<1x8x16xf32, #tpu.memory_space<vmem>>, vector<1x8x16xf32>
    %5 = vector.shape_cast %4 : vector<1x8x16xf32> to vector<8x16xf32>
    %cst = arith.constant 0.000000e+00 : f32
    %6 = vector.broadcast %cst : f32 to vector<16x128xf32>
    %c0_5 = arith.constant 0 : index
    %c0_6 = arith.constant 0 : index
    %7 = vector.load %arg11[%c0_5, %c0_6] : memref<16x128xf32, #tpu.memory_space<vmem>>, vector<16x128xf32>
    tpu.vector_store %arg11[%c0_5, %c0_6], %6 {strides = array<i32>} : memref<16x128xf32, #tpu.memory_space<vmem>>, vector<16x128xf32>,
    %cst_7 = arith.constant 0.000000e+00 : f32
    %8 = vector.broadcast %cst_7 : f32 to vector<16x128xf32>
    %c0_8 = arith.constant 0 : index
    %c0_9 = arith.constant 0 : index
    %9 = vector.load %arg12[%c0_8, %c0_9] : memref<16x128xf32, #tpu.memory_space<vmem>>, vector<16x128xf32>
    tpu.vector_store %arg12[%c0_8, %c0_9], %8 {strides = array<i32>} : memref<16x128xf32, #tpu.memory_space<vmem>>, vector<16x128xf32>,
    %c0_10 = arith.constant 0 : index
    %c0_11 = arith.constant 0 : index
    %10 = vector.load %arg11[%c0_10, %c0_11] : memref<16x128xf32, #tpu.memory_space<vmem>>, vector<8x16xf32>
    tpu.vector_store %arg11[%c0_10, %c0_11], %3 {strides = array<i32>} : memref<16x128xf32, #tpu.memory_space<vmem>>, vector<8x16xf32>,
    %c0_12 = arith.constant 0 : index
    %c0_13 = arith.constant 0 : index
    %11 = vector.load %arg12[%c0_12, %c0_13] : memref<16x128xf32, #tpu.memory_space<vmem>>, vector<8x16xf32>
    tpu.vector_store %arg12[%c0_12, %c0_13], %5 {strides = array<i32>} : memref<16x128xf32, #tpu.memory_space<vmem>>, vector<8x16xf32>,
    %cst_14 = arith.constant 0.000000e+00 : f32
    %12 = vector.broadcast %cst_14 : f32 to vector<2x16xf32>
    %c0_15 = arith.constant 0 : index
    %c0_16 = arith.constant 0 : index
    %c0_17 = arith.constant 0 : index
    %13 = vector.load %arg6[%c0_15, %c0_16, %c0_17] : memref<1x8x16xf32, #tpu.memory_space<vmem>>, vector<1x2x16xf32>
    %14 = vector.shape_cast %13 : vector<1x2x16xf32> to vector<2x16xf32>
    %15 = arith.select %1, %12, %14 : vector<2x16xf32>
    %c8 = arith.constant 8 : index
    %c0_18 = arith.constant 0 : index
    %16 = vector.load %arg11[%c8, %c0_18] : memref<16x128xf32, #tpu.memory_space<vmem>>, vector<2x16xf32>
    tpu.vector_store %arg11[%c8, %c0_18], %15 {strides = array<i32>} : memref<16x128xf32, #tpu.memory_space<vmem>>, vector<2x16xf32>,
    %c0_19 = arith.constant 0 : index
    %c0_20 = arith.constant 0 : index
    %c0_21 = arith.constant 0 : index
    %17 = vector.load %arg8[%c0_19, %c0_20, %c0_21] : memref<1x8x16xf32, #tpu.memory_space<vmem>>, vector<1x2x16xf32>
    %18 = vector.shape_cast %17 : vector<1x2x16xf32> to vector<2x16xf32>
    %19 = arith.select %1, %12, %18 : vector<2x16xf32>
    %c8_22 = arith.constant 8 : index
    %c0_23 = arith.constant 0 : index
    %20 = vector.load %arg12[%c8_22, %c0_23] : memref<16x128xf32, #tpu.memory_space<vmem>>, vector<2x16xf32>
    tpu.vector_store %arg12[%c8_22, %c0_23], %19 {strides = array<i32>} : memref<16x128xf32, #tpu.memory_space<vmem>>, vector<2x16xf32>,
    %c0_24 = arith.constant 0 : index
    %c6 = arith.constant 6 : index
    %c0_25 = arith.constant 0 : index
    %21 = vector.load %arg5[%c0_24, %c6, %c0_25] : memref<1x8x16xf32, #tpu.memory_space<vmem>>, vector<1x2x16xf32>
    %22 = vector.shape_cast %21 : vector<1x2x16xf32> to vector<2x16xf32>
    %23 = arith.select %0, %12, %22 : vector<2x16xf32>
    %c14 = arith.constant 14 : index
    %c0_26 = arith.constant 0 : index
    %24 = vector.load %arg11[%c14, %c0_26] : memref<16x128xf32, #tpu.memory_space<vmem>>, vector<2x16xf32>
    tpu.vector_store %arg11[%c14, %c0_26], %23 {strides = array<i32>} : memref<16x128xf32, #tpu.memory_space<vmem>>, vector<2x16xf32>,
    %c0_27 = arith.constant 0 : index
    %c6_28 = arith.constant 6 : index
    %c0_29 = arith.constant 0 : index
    %25 = vector.load %arg7[%c0_27, %c6_28, %c0_29] : memref<1x8x16xf32, #tpu.memory_space<vmem>>, vector<1x2x16xf32>
    %26 = vector.shape_cast %25 : vector<1x2x16xf32> to vector<2x16xf32>
    %27 = arith.select %0, %12, %26 : vector<2x16xf32>
    %c14_30 = arith.constant 14 : index
    %c0_31 = arith.constant 0 : index
    %28 = vector.load %arg12[%c14_30, %c0_31] : memref<16x128xf32, #tpu.memory_space<vmem>>, vector<2x16xf32>
    tpu.vector_store %arg12[%c14_30, %c0_31], %27 {strides = array<i32>} : memref<16x128xf32, #tpu.memory_space<vmem>>, vector<2x16xf32>,
    %cst_32 = arith.constant 0.000000e+00 : f32
    %29 = vector.broadcast %cst_32 : f32 to vector<8x16xf32>
    %30 = arith.cmpf ogt, %5, %29 : vector<8x16xf32>
    %31 = arith.extui %30 : vector<8x16xi1> to vector<8x16xi32>
    %32 = arith.sitofp %31 : vector<8x16xi32> to vector<8x16xf32>
    %33 = arith.subf %3, %5 : vector<8x16xf32>
    %34 = math.absf %33 : vector<8x16xf32>
    %35 = arith.mulf %34, %32 : vector<8x16xf32>
    %cst_33 = arith.constant 1.000000e+00 : f32
    %36 = vector.broadcast %cst_33 : f32 to vector<8x16xf32>
    %37 = arith.cmpf olt, %35, %36 : vector<8x16xf32>
    %cst_34 = arith.constant 5.000000e-01 : f32
    %38 = vector.broadcast %cst_34 : f32 to vector<8x16xf32>
    %39 = arith.mulf %38, %35 : vector<8x16xf32>
    %40 = arith.mulf %39, %35 : vector<8x16xf32>
    %cst_35 = arith.constant 5.000000e-01 : f32
    %41 = vector.broadcast %cst_35 : f32 to vector<8x16xf32>
    %42 = arith.subf %35, %41 : vector<8x16xf32>
    %43 = arith.select %37, %40, %42 : vector<8x16xi1>, vector<8x16xf32>
    %44 = vector.shape_cast %43 : vector<8x16xf32> to vector<1x8x16xf32>
    %cst_36 = arith.constant dense<0.000000e+00> : vector<1xf32>
    %45 = vector.multi_reduction <add>, %44, %cst_36 [1, 2] : vector<1x8x16xf32> to vector<1xf32>
    %46 = vector.shape_cast %45 : vector<1xf32> to vector<1x1x1xf32>
    %47 = vector.extract %46[0, 0, 0] : f32 from vector<1x1x1xf32>
    %48 = vector.shape_cast %32 : vector<8x16xf32> to vector<1x8x16xf32>
    %cst_37 = arith.constant dense<0.000000e+00> : vector<1xf32>
    %49 = vector.multi_reduction <add>, %48, %cst_37 [1, 2] : vector<1x8x16xf32> to vector<1xf32>
    %50 = vector.shape_cast %49 : vector<1xf32> to vector<1x1x1xf32>
    %51 = vector.extract %50[0, 0, 0] : f32 from vector<1x1x1xf32>
    %c0_38 = arith.constant 0 : index
    %c0_39 = arith.constant 0 : index
    %52 = vector.load %arg11[%c0_38, %c0_39] : memref<16x128xf32, #tpu.memory_space<vmem>>, vector<16x128xf32>
    %c0_40 = arith.constant 0 : index
    %c0_41 = arith.constant 0 : index
    %53 = vector.load %arg12[%c0_40, %c0_41] : memref<16x128xf32, #tpu.memory_space<vmem>>, vector<16x128xf32>
    %cst_42 = arith.constant 0.000000e+00 : f32
    %54 = vector.broadcast %cst_42 : f32 to vector<16x128xf32>
    %55 = arith.cmpf ogt, %53, %54 : vector<16x128xf32>
    %56 = arith.extui %55 : vector<16x128xi1> to vector<16x128xi32>
    %57 = arith.sitofp %56 : vector<16x128xi32> to vector<16x128xf32>
    %58 = arith.mulf %52, %57 : vector<16x128xf32>
    %59 = arith.mulf %53, %57 : vector<16x128xf32>
    %cst_43 = arith.constant 0.292081714 : f32
    %60 = vector.broadcast %cst_43 : f32 to vector<16x128xf32>
    %61 = arith.mulf %60, %58 : vector<16x128xf32>
    %c1_i32_44 = arith.constant 1 : i32
    %62 = tpu.dynamic_rotate %58 by %c1_i32_44 dim 0 : vector<16x128xf32>, i32 -> vector<16x128xf32>
    %c15_i32 = arith.constant 15 : i32
    %63 = tpu.dynamic_rotate %58 by %c15_i32 dim 0 : vector<16x128xf32>, i32 -> vector<16x128xf32>
    %64 = arith.addf %62, %63 : vector<16x128xf32>
    %cst_45 = arith.constant 0.233880758 : f32
    %65 = vector.broadcast %cst_45 : f32 to vector<16x128xf32>
    %66 = arith.mulf %65, %64 : vector<16x128xf32>
    %67 = arith.addf %61, %66 : vector<16x128xf32>
    %c2_i32 = arith.constant 2 : i32
    %68 = tpu.dynamic_rotate %58 by %c2_i32 dim 0 : vector<16x128xf32>, i32 -> vector<16x128xf32>
    %c14_i32 = arith.constant 14 : i32
    %69 = tpu.dynamic_rotate %58 by %c14_i32 dim 0 : vector<16x128xf32>, i32 -> vector<16x128xf32>
    %70 = arith.addf %68, %69 : vector<16x128xf32>
    %cst_46 = arith.constant 0.120078385 : f32
    %71 = vector.broadcast %cst_46 : f32 to vector<16x128xf32>
    %72 = arith.mulf %71, %70 : vector<16x128xf32>
    %73 = arith.addf %67, %72 : vector<16x128xf32>
    %cst_47 = arith.constant 0.292081714 : f32
    %74 = vector.broadcast %cst_47 : f32 to vector<16x128xf32>
    %75 = arith.mulf %74, %73 : vector<16x128xf32>
    %c1_i32_48 = arith.constant 1 : i32
    %76 = tpu.dynamic_rotate %73 by %c1_i32_48 dim 1 : vector<16x128xf32>, i32 -> vector<16x128xf32>
    %c127_i32 = arith.constant 127 : i32
    %77 = tpu.dynamic_rotate %73 by %c127_i32 dim 1 : vector<16x128xf32>, i32 -> vector<16x128xf32>
    %78 = arith.addf %76, %77 : vector<16x128xf32>
    %cst_49 = arith.constant 0.233880758 : f32
    %79 = vector.broadcast %cst_49 : f32 to vector<16x128xf32>
    %80 = arith.mulf %79, %78 : vector<16x128xf32>
    %81 = arith.addf %75, %80 : vector<16x128xf32>
    %c2_i32_50 = arith.constant 2 : i32
    %82 = tpu.dynamic_rotate %73 by %c2_i32_50 dim 1 : vector<16x128xf32>, i32 -> vector<16x128xf32>
    %c126_i32 = arith.constant 126 : i32
    %83 = tpu.dynamic_rotate %73 by %c126_i32 dim 1 : vector<16x128xf32>, i32 -> vector<16x128xf32>
    %84 = arith.addf %82, %83 : vector<16x128xf32>
    %cst_51 = arith.constant 0.120078385 : f32
    %85 = vector.broadcast %cst_51 : f32 to vector<16x128xf32>
    %86 = arith.mulf %85, %84 : vector<16x128xf32>
    %87 = arith.addf %81, %86 : vector<16x128xf32>
    %cst_52 = arith.constant 0.292081714 : f32
    %88 = vector.broadcast %cst_52 : f32 to vector<16x128xf32>
    %89 = arith.mulf %88, %59 : vector<16x128xf32>
    %c1_i32_53 = arith.constant 1 : i32
    %90 = tpu.dynamic_rotate %59 by %c1_i32_53 dim 0 : vector<16x128xf32>, i32 -> vector<16x128xf32>
    %c15_i32_54 = arith.constant 15 : i32
    %91 = tpu.dynamic_rotate %59 by %c15_i32_54 dim 0 : vector<16x128xf32>, i32 -> vector<16x128xf32>
    %92 = arith.addf %90, %91 : vector<16x128xf32>
    %cst_55 = arith.constant 0.233880758 : f32
    %93 = vector.broadcast %cst_55 : f32 to vector<16x128xf32>
    %94 = arith.mulf %93, %92 : vector<16x128xf32>
    %95 = arith.addf %89, %94 : vector<16x128xf32>
    %c2_i32_56 = arith.constant 2 : i32
    %96 = tpu.dynamic_rotate %59 by %c2_i32_56 dim 0 : vector<16x128xf32>, i32 -> vector<16x128xf32>
    %c14_i32_57 = arith.constant 14 : i32
    %97 = tpu.dynamic_rotate %59 by %c14_i32_57 dim 0 : vector<16x128xf32>, i32 -> vector<16x128xf32>
    %98 = arith.addf %96, %97 : vector<16x128xf32>
    %cst_58 = arith.constant 0.120078385 : f32
    %99 = vector.broadcast %cst_58 : f32 to vector<16x128xf32>
    %100 = arith.mulf %99, %98 : vector<16x128xf32>
    %101 = arith.addf %95, %100 : vector<16x128xf32>
    %cst_59 = arith.constant 0.292081714 : f32
    %102 = vector.broadcast %cst_59 : f32 to vector<16x128xf32>
    %103 = arith.mulf %102, %101 : vector<16x128xf32>
    %c1_i32_60 = arith.constant 1 : i32
    %104 = tpu.dynamic_rotate %101 by %c1_i32_60 dim 1 : vector<16x128xf32>, i32 -> vector<16x128xf32>
    %c127_i32_61 = arith.constant 127 : i32
    %105 = tpu.dynamic_rotate %101 by %c127_i32_61 dim 1 : vector<16x128xf32>, i32 -> vector<16x128xf32>
    %106 = arith.addf %104, %105 : vector<16x128xf32>
    %cst_62 = arith.constant 0.233880758 : f32
    %107 = vector.broadcast %cst_62 : f32 to vector<16x128xf32>
    %108 = arith.mulf %107, %106 : vector<16x128xf32>
    %109 = arith.addf %103, %108 : vector<16x128xf32>
    %c2_i32_63 = arith.constant 2 : i32
    %110 = tpu.dynamic_rotate %101 by %c2_i32_63 dim 1 : vector<16x128xf32>, i32 -> vector<16x128xf32>
    %c126_i32_64 = arith.constant 126 : i32
    %111 = tpu.dynamic_rotate %101 by %c126_i32_64 dim 1 : vector<16x128xf32>, i32 -> vector<16x128xf32>
    %112 = arith.addf %110, %111 : vector<16x128xf32>
    %cst_65 = arith.constant 0.120078385 : f32
    %113 = vector.broadcast %cst_65 : f32 to vector<16x128xf32>
    %114 = arith.mulf %113, %112 : vector<16x128xf32>
    %115 = arith.addf %109, %114 : vector<16x128xf32>
    %116 = arith.mulf %87, %115 : vector<16x128xf32>
    %117 = arith.mulf %87, %87 : vector<16x128xf32>
    %118 = arith.mulf %115, %115 : vector<16x128xf32>
    %119 = arith.addf %117, %118 : vector<16x128xf32>
    %cst_66 = arith.constant 2.000000e+00 : f32
    %120 = vector.broadcast %cst_66 : f32 to vector<16x128xf32>
    %121 = arith.mulf %120, %116 : vector<16x128xf32>
    %cst_67 = arith.constant 9.99999974E-5 : f32
    %122 = vector.broadcast %cst_67 : f32 to vector<16x128xf32>
    %123 = arith.addf %121, %122 : vector<16x128xf32>
    %124 = arith.mulf %58, %59 : vector<16x128xf32>
    %cst_68 = arith.constant 0.292081714 : f32
    %125 = vector.broadcast %cst_68 : f32 to vector<16x128xf32>
    %126 = arith.mulf %125, %124 : vector<16x128xf32>
    %c1_i32_69 = arith.constant 1 : i32
    %127 = tpu.dynamic_rotate %124 by %c1_i32_69 dim 0 : vector<16x128xf32>, i32 -> vector<16x128xf32>
    %c15_i32_70 = arith.constant 15 : i32
    %128 = tpu.dynamic_rotate %124 by %c15_i32_70 dim 0 : vector<16x128xf32>, i32 -> vector<16x128xf32>
    %129 = arith.addf %127, %128 : vector<16x128xf32>
    %cst_71 = arith.constant 0.233880758 : f32
    %130 = vector.broadcast %cst_71 : f32 to vector<16x128xf32>
    %131 = arith.mulf %130, %129 : vector<16x128xf32>
    %132 = arith.addf %126, %131 : vector<16x128xf32>
    %c2_i32_72 = arith.constant 2 : i32
    %133 = tpu.dynamic_rotate %124 by %c2_i32_72 dim 0 : vector<16x128xf32>, i32 -> vector<16x128xf32>
    %c14_i32_73 = arith.constant 14 : i32
    %134 = tpu.dynamic_rotate %124 by %c14_i32_73 dim 0 : vector<16x128xf32>, i32 -> vector<16x128xf32>
    %135 = arith.addf %133, %134 : vector<16x128xf32>
    %cst_74 = arith.constant 0.120078385 : f32
    %136 = vector.broadcast %cst_74 : f32 to vector<16x128xf32>
    %137 = arith.mulf %136, %135 : vector<16x128xf32>
    %138 = arith.addf %132, %137 : vector<16x128xf32>
    %cst_75 = arith.constant 0.292081714 : f32
    %139 = vector.broadcast %cst_75 : f32 to vector<16x128xf32>
    %140 = arith.mulf %139, %138 : vector<16x128xf32>
    %c1_i32_76 = arith.constant 1 : i32
    %141 = tpu.dynamic_rotate %138 by %c1_i32_76 dim 1 : vector<16x128xf32>, i32 -> vector<16x128xf32>
    %c127_i32_77 = arith.constant 127 : i32
    %142 = tpu.dynamic_rotate %138 by %c127_i32_77 dim 1 : vector<16x128xf32>, i32 -> vector<16x128xf32>
    %143 = arith.addf %141, %142 : vector<16x128xf32>
    %cst_78 = arith.constant 0.233880758 : f32
    %144 = vector.broadcast %cst_78 : f32 to vector<16x128xf32>
    %145 = arith.mulf %144, %143 : vector<16x128xf32>
    %146 = arith.addf %140, %145 : vector<16x128xf32>
    %c2_i32_79 = arith.constant 2 : i32
    %147 = tpu.dynamic_rotate %138 by %c2_i32_79 dim 1 : vector<16x128xf32>, i32 -> vector<16x128xf32>
    %c126_i32_80 = arith.constant 126 : i32
    %148 = tpu.dynamic_rotate %138 by %c126_i32_80 dim 1 : vector<16x128xf32>, i32 -> vector<16x128xf32>
    %149 = arith.addf %147, %148 : vector<16x128xf32>
    %cst_81 = arith.constant 0.120078385 : f32
    %150 = vector.broadcast %cst_81 : f32 to vector<16x128xf32>
    %151 = arith.mulf %150, %149 : vector<16x128xf32>
    %152 = arith.addf %146, %151 : vector<16x128xf32>
    %153 = arith.subf %152, %116 : vector<16x128xf32>
    %cst_82 = arith.constant 2.000000e+00 : f32
    %154 = vector.broadcast %cst_82 : f32 to vector<16x128xf32>
    %155 = arith.mulf %154, %153 : vector<16x128xf32>
    %cst_83 = arith.constant 8.99999984E-4 : f32
    %156 = vector.broadcast %cst_83 : f32 to vector<16x128xf32>
    %157 = arith.addf %155, %156 : vector<16x128xf32>
    %158 = arith.mulf %123, %157 : vector<16x128xf32>
    %cst_84 = arith.constant 9.99999974E-5 : f32
    %159 = vector.broadcast %cst_84 : f32 to vector<16x128xf32>
    %160 = arith.addf %119, %159 : vector<16x128xf32>
    %161 = arith.mulf %58, %58 : vector<16x128xf32>
    %cst_85 = arith.constant 0.292081714 : f32
    %162 = vector.broadcast %cst_85 : f32 to vector<16x128xf32>
    %163 = arith.mulf %162, %161 : vector<16x128xf32>
    %c1_i32_86 = arith.constant 1 : i32
    %164 = tpu.dynamic_rotate %161 by %c1_i32_86 dim 0 : vector<16x128xf32>, i32 -> vector<16x128xf32>
    %c15_i32_87 = arith.constant 15 : i32
    %165 = tpu.dynamic_rotate %161 by %c15_i32_87 dim 0 : vector<16x128xf32>, i32 -> vector<16x128xf32>
    %166 = arith.addf %164, %165 : vector<16x128xf32>
    %cst_88 = arith.constant 0.233880758 : f32
    %167 = vector.broadcast %cst_88 : f32 to vector<16x128xf32>
    %168 = arith.mulf %167, %166 : vector<16x128xf32>
    %169 = arith.addf %163, %168 : vector<16x128xf32>
    %c2_i32_89 = arith.constant 2 : i32
    %170 = tpu.dynamic_rotate %161 by %c2_i32_89 dim 0 : vector<16x128xf32>, i32 -> vector<16x128xf32>
    %c14_i32_90 = arith.constant 14 : i32
    %171 = tpu.dynamic_rotate %161 by %c14_i32_90 dim 0 : vector<16x128xf32>, i32 -> vector<16x128xf32>
    %172 = arith.addf %170, %171 : vector<16x128xf32>
    %cst_91 = arith.constant 0.120078385 : f32
    %173 = vector.broadcast %cst_91 : f32 to vector<16x128xf32>
    %174 = arith.mulf %173, %172 : vector<16x128xf32>
    %175 = arith.addf %169, %174 : vector<16x128xf32>
    %cst_92 = arith.constant 0.292081714 : f32
    %176 = vector.broadcast %cst_92 : f32 to vector<16x128xf32>
    %177 = arith.mulf %176, %175 : vector<16x128xf32>
    %c1_i32_93 = arith.constant 1 : i32
    %178 = tpu.dynamic_rotate %175 by %c1_i32_93 dim 1 : vector<16x128xf32>, i32 -> vector<16x128xf32>
    %c127_i32_94 = arith.constant 127 : i32
    %179 = tpu.dynamic_rotate %175 by %c127_i32_94 dim 1 : vector<16x128xf32>, i32 -> vector<16x128xf32>
    %180 = arith.addf %178, %179 : vector<16x128xf32>
    %cst_95 = arith.constant 0.233880758 : f32
    %181 = vector.broadcast %cst_95 : f32 to vector<16x128xf32>
    %182 = arith.mulf %181, %180 : vector<16x128xf32>
    %183 = arith.addf %177, %182 : vector<16x128xf32>
    %c2_i32_96 = arith.constant 2 : i32
    %184 = tpu.dynamic_rotate %175 by %c2_i32_96 dim 1 : vector<16x128xf32>, i32 -> vector<16x128xf32>
    %c126_i32_97 = arith.constant 126 : i32
    %185 = tpu.dynamic_rotate %175 by %c126_i32_97 dim 1 : vector<16x128xf32>, i32 -> vector<16x128xf32>
    %186 = arith.addf %184, %185 : vector<16x128xf32>
    %cst_98 = arith.constant 0.120078385 : f32
    %187 = vector.broadcast %cst_98 : f32 to vector<16x128xf32>
    %188 = arith.mulf %187, %186 : vector<16x128xf32>
    %189 = arith.addf %183, %188 : vector<16x128xf32>
    %190 = arith.mulf %59, %59 : vector<16x128xf32>
    %cst_99 = arith.constant 0.292081714 : f32
    %191 = vector.broadcast %cst_99 : f32 to vector<16x128xf32>
    %192 = arith.mulf %191, %190 : vector<16x128xf32>
    %c1_i32_100 = arith.constant 1 : i32
    %193 = tpu.dynamic_rotate %190 by %c1_i32_100 dim 0 : vector<16x128xf32>, i32 -> vector<16x128xf32>
    %c15_i32_101 = arith.constant 15 : i32
    %194 = tpu.dynamic_rotate %190 by %c15_i32_101 dim 0 : vector<16x128xf32>, i32 -> vector<16x128xf32>
    %195 = arith.addf %193, %194 : vector<16x128xf32>
    %cst_102 = arith.constant 0.233880758 : f32
    %196 = vector.broadcast %cst_102 : f32 to vector<16x128xf32>
    %197 = arith.mulf %196, %195 : vector<16x128xf32>
    %198 = arith.addf %192, %197 : vector<16x128xf32>
    %c2_i32_103 = arith.constant 2 : i32
    %199 = tpu.dynamic_rotate %190 by %c2_i32_103 dim 0 : vector<16x128xf32>, i32 -> vector<16x128xf32>
    %c14_i32_104 = arith.constant 14 : i32
    %200 = tpu.dynamic_rotate %190 by %c14_i32_104 dim 0 : vector<16x128xf32>, i32 -> vector<16x128xf32>
    %201 = arith.addf %199, %200 : vector<16x128xf32>
    %cst_105 = arith.constant 0.120078385 : f32
    %202 = vector.broadcast %cst_105 : f32 to vector<16x128xf32>
    %203 = arith.mulf %202, %201 : vector<16x128xf32>
    %204 = arith.addf %198, %203 : vector<16x128xf32>
    %cst_106 = arith.constant 0.292081714 : f32
    %205 = vector.broadcast %cst_106 : f32 to vector<16x128xf32>
    %206 = arith.mulf %205, %204 : vector<16x128xf32>
    %c1_i32_107 = arith.constant 1 : i32
    %207 = tpu.dynamic_rotate %204 by %c1_i32_107 dim 1 : vector<16x128xf32>, i32 -> vector<16x128xf32>
    %c127_i32_108 = arith.constant 127 : i32
    %208 = tpu.dynamic_rotate %204 by %c127_i32_108 dim 1 : vector<16x128xf32>, i32 -> vector<16x128xf32>
    %209 = arith.addf %207, %208 : vector<16x128xf32>
    %cst_109 = arith.constant 0.233880758 : f32
    %210 = vector.broadcast %cst_109 : f32 to vector<16x128xf32>
    %211 = arith.mulf %210, %209 : vector<16x128xf32>
    %212 = arith.addf %206, %211 : vector<16x128xf32>
    %c2_i32_110 = arith.constant 2 : i32
    %213 = tpu.dynamic_rotate %204 by %c2_i32_110 dim 1 : vector<16x128xf32>, i32 -> vector<16x128xf32>
    %c126_i32_111 = arith.constant 126 : i32
    %214 = tpu.dynamic_rotate %204 by %c126_i32_111 dim 1 : vector<16x128xf32>, i32 -> vector<16x128xf32>
    %215 = arith.addf %213, %214 : vector<16x128xf32>
    %cst_112 = arith.constant 0.120078385 : f32
    %216 = vector.broadcast %cst_112 : f32 to vector<16x128xf32>
    %217 = arith.mulf %216, %215 : vector<16x128xf32>
    %218 = arith.addf %212, %217 : vector<16x128xf32>
    %219 = arith.addf %189, %218 : vector<16x128xf32>
    %220 = arith.subf %219, %119 : vector<16x128xf32>
    %cst_113 = arith.constant 8.99999984E-4 : f32
    %221 = vector.broadcast %cst_113 : f32 to vector<16x128xf32>
    %222 = arith.addf %220, %221 : vector<16x128xf32>
    %223 = arith.mulf %160, %222 : vector<16x128xf32>
    %224 = arith.divf %158, %223 : vector<16x128xf32>
    %225 = tpu.iota {dimensions = array<i32: 0>} : vector<16x128xi32>
    %226 = tpu.iota {dimensions = array<i32: 1>} : vector<16x128xi32>
    %c8_i32 = arith.constant 8 : i32
    %227 = vector.broadcast %c8_i32 : i32 to vector<16x128xi32>
    %228 = arith.cmpi slt, %225, %227 : vector<16x128xi32>
    %c16_i32 = arith.constant 16 : i32
    %229 = vector.broadcast %c16_i32 : i32 to vector<16x128xi32>
    %230 = arith.cmpi slt, %226, %229 : vector<16x128xi32>
    %231 = arith.andi %228, %230 : vector<16x128xi1>
    %cst_114 = arith.constant 0.000000e+00 : f32
    %232 = vector.broadcast %cst_114 : f32 to vector<16x128xf32>
    %233 = arith.select %231, %224, %232 : vector<16x128xi1>, vector<16x128xf32>
    %234 = vector.shape_cast %233 : vector<16x128xf32> to vector<1x16x128xf32>
    %cst_115 = arith.constant dense<0.000000e+00> : vector<1xf32>
    %235 = vector.multi_reduction <add>, %234, %cst_115 [1, 2] : vector<1x16x128xf32> to vector<1xf32>
    %236 = vector.shape_cast %235 : vector<1xf32> to vector<1x1x1xf32>
    %237 = vector.extract %236[0, 0, 0] : f32 from vector<1x1x1xf32>
    %c0_116 = arith.constant 0 : index
    %c0_117 = arith.constant 0 : index
    %c0_118 = arith.constant 0 : index
    %c0_119 = arith.constant 0 : index
    %238 = vector.load %arg4[%c0_116, %c0_117, %c0_118, %c0_119] : memref<1x3x8x16xf32, #tpu.memory_space<vmem>>, vector<1x3x8x16xf32>
    %239 = vector.shape_cast %238 : vector<1x3x8x16xf32> to vector<3x8x16xf32>
    %240 = vector.extract_strided_slice %3 {offsets = [0, 0], sizes = [8, 15], strides = [1, 1]} : vector<8x16xf32> to vector<8x15xf32>
    %241 = vector.extract_strided_slice %3 {offsets = [0, 1], sizes = [8, 15], strides = [1, 1]} : vector<8x16xf32> to vector<8x15xf32>
    %242 = arith.subf %240, %241 : vector<8x15xf32>
    %243 = math.absf %242 : vector<8x15xf32>
    %244 = vector.extract_strided_slice %239 {offsets = [0, 0, 0], sizes = [1, 8, 15], strides = [1, 1, 1]} : vector<3x8x16xf32> to vector<1x8x15xf32>
    %245 = vector.shape_cast %244 : vector<1x8x15xf32> to vector<8x15xf32>
    %246 = vector.extract_strided_slice %239 {offsets = [0, 0, 1], sizes = [1, 8, 15], strides = [1, 1, 1]} : vector<3x8x16xf32> to vector<1x8x15xf32>
    %247 = vector.shape_cast %246 : vector<1x8x15xf32> to vector<8x15xf32>
    %248 = arith.subf %245, %247 : vector<8x15xf32>
    %249 = math.absf %248 : vector<8x15xf32>
    %250 = vector.extract_strided_slice %239 {offsets = [1, 0, 0], sizes = [1, 8, 15], strides = [1, 1, 1]} : vector<3x8x16xf32> to vector<1x8x15xf32>
    %251 = vector.shape_cast %250 : vector<1x8x15xf32> to vector<8x15xf32>
    %252 = vector.extract_strided_slice %239 {offsets = [1, 0, 1], sizes = [1, 8, 15], strides = [1, 1, 1]} : vector<3x8x16xf32> to vector<1x8x15xf32>
    %253 = vector.shape_cast %252 : vector<1x8x15xf32> to vector<8x15xf32>
    %254 = arith.subf %251, %253 : vector<8x15xf32>
    %255 = math.absf %254 : vector<8x15xf32>
    %256 = arith.addf %249, %255 : vector<8x15xf32>
    %257 = vector.extract_strided_slice %239 {offsets = [2, 0, 0], sizes = [1, 8, 15], strides = [1, 1, 1]} : vector<3x8x16xf32> to vector<1x8x15xf32>
    %258 = vector.shape_cast %257 : vector<1x8x15xf32> to vector<8x15xf32>
    %259 = vector.extract_strided_slice %239 {offsets = [2, 0, 1], sizes = [1, 8, 15], strides = [1, 1, 1]} : vector<3x8x16xf32> to vector<1x8x15xf32>
    %260 = vector.shape_cast %259 : vector<1x8x15xf32> to vector<8x15xf32>
    %261 = arith.subf %258, %260 : vector<8x15xf32>
    %262 = math.absf %261 : vector<8x15xf32>
    %263 = arith.addf %256, %262 : vector<8x15xf32>
    %cst_120 = arith.constant -3.33333325 : f32
    %264 = vector.broadcast %cst_120 : f32 to vector<8x15xf32>
    %265 = arith.mulf %264, %263 : vector<8x15xf32>
    %266 = math.exp %265 : vector<8x15xf32>
    %267 = arith.mulf %243, %266 : vector<8x15xf32>
    %268 = vector.shape_cast %267 : vector<8x15xf32> to vector<1x8x15xf32>
    %cst_121 = arith.constant dense<0.000000e+00> : vector<1xf32>
    %269 = vector.multi_reduction <add>, %268, %cst_121 [1, 2] : vector<1x8x15xf32> to vector<1xf32>
    %270 = vector.shape_cast %269 : vector<1xf32> to vector<1x1x1xf32>
    %271 = vector.extract %270[0, 0, 0] : f32 from vector<1x1x1xf32>
    %272 = vector.extract_strided_slice %3 {offsets = [0, 0], sizes = [7, 16], strides = [1, 1]} : vector<8x16xf32> to vector<7x16xf32>
    %273 = vector.extract_strided_slice %3 {offsets = [1, 0], sizes = [7, 16], strides = [1, 1]} : vector<8x16xf32> to vector<7x16xf32>
    %274 = arith.subf %272, %273 : vector<7x16xf32>
    %275 = math.absf %274 : vector<7x16xf32>
    %276 = vector.extract_strided_slice %239 {offsets = [0, 0, 0], sizes = [1, 7, 16], strides = [1, 1, 1]} : vector<3x8x16xf32> to vector<1x7x16xf32>
    %277 = vector.shape_cast %276 : vector<1x7x16xf32> to vector<7x16xf32>
    %278 = vector.extract_strided_slice %239 {offsets = [0, 1, 0], sizes = [1, 7, 16], strides = [1, 1, 1]} : vector<3x8x16xf32> to vector<1x7x16xf32>
    %279 = vector.shape_cast %278 : vector<1x7x16xf32> to vector<7x16xf32>
    %280 = arith.subf %277, %279 : vector<7x16xf32>
    %281 = math.absf %280 : vector<7x16xf32>
    %282 = vector.extract_strided_slice %239 {offsets = [1, 0, 0], sizes = [1, 7, 16], strides = [1, 1, 1]} : vector<3x8x16xf32> to vector<1x7x16xf32>
    %283 = vector.shape_cast %282 : vector<1x7x16xf32> to vector<7x16xf32>
    %284 = vector.extract_strided_slice %239 {offsets = [1, 1, 0], sizes = [1, 7, 16], strides = [1, 1, 1]} : vector<3x8x16xf32> to vector<1x7x16xf32>
    %285 = vector.shape_cast %284 : vector<1x7x16xf32> to vector<7x16xf32>
    %286 = arith.subf %283, %285 : vector<7x16xf32>
    %287 = math.absf %286 : vector<7x16xf32>
    %288 = arith.addf %281, %287 : vector<7x16xf32>
    %289 = vector.extract_strided_slice %239 {offsets = [2, 0, 0], sizes = [1, 7, 16], strides = [1, 1, 1]} : vector<3x8x16xf32> to vector<1x7x16xf32>
    %290 = vector.shape_cast %289 : vector<1x7x16xf32> to vector<7x16xf32>
    %291 = vector.extract_strided_slice %239 {offsets = [2, 1, 0], sizes = [1, 7, 16], strides = [1, 1, 1]} : vector<3x8x16xf32> to vector<1x7x16xf32>
    %292 = vector.shape_cast %291 : vector<1x7x16xf32> to vector<7x16xf32>
    %293 = arith.subf %290, %292 : vector<7x16xf32>
    %294 = math.absf %293 : vector<7x16xf32>
    %295 = arith.addf %288, %294 : vector<7x16xf32>
    %cst_122 = arith.constant -3.33333325 : f32
    %296 = vector.broadcast %cst_122 : f32 to vector<7x16xf32>
    %297 = arith.mulf %296, %295 : vector<7x16xf32>
    %298 = math.exp %297 : vector<7x16xf32>
    %299 = arith.mulf %275, %298 : vector<7x16xf32>
    %300 = vector.shape_cast %299 : vector<7x16xf32> to vector<1x7x16xf32>
    %cst_123 = arith.constant dense<0.000000e+00> : vector<1xf32>
    %301 = vector.multi_reduction <add>, %300, %cst_123 [1, 2] : vector<1x7x16xf32> to vector<1xf32>
    %302 = vector.shape_cast %301 : vector<1xf32> to vector<1x1x1xf32>
    %303 = vector.extract %302[0, 0, 0] : f32 from vector<1x1x1xf32>
    %304 = vector.extract_strided_slice %3 {offsets = [7, 0], sizes = [1, 16], strides = [1, 1]} : vector<8x16xf32> to vector<1x16xf32>
    %c0_124 = arith.constant 0 : index
    %c0_125 = arith.constant 0 : index
    %c0_126 = arith.constant 0 : index
    %305 = vector.load %arg6[%c0_124, %c0_125, %c0_126] : memref<1x8x16xf32, #tpu.memory_space<vmem>>, vector<1x1x16xf32>
    %306 = vector.shape_cast %305 : vector<1x1x16xf32> to vector<1x16xf32>
    %307 = arith.subf %304, %306 : vector<1x16xf32>
    %308 = math.absf %307 : vector<1x16xf32>
    %309 = vector.extract_strided_slice %239 {offsets = [0, 7, 0], sizes = [1, 1, 16], strides = [1, 1, 1]} : vector<3x8x16xf32> to vector<1x1x16xf32>
    %310 = vector.shape_cast %309 : vector<1x1x16xf32> to vector<1x16xf32>
    %c0_127 = arith.constant 0 : index
    %c0_128 = arith.constant 0 : index
    %c0_129 = arith.constant 0 : index
    %c0_130 = arith.constant 0 : index
    %311 = vector.load %arg9[%c0_127, %c0_128, %c0_129, %c0_130] : memref<1x3x8x16xf32, #tpu.memory_space<vmem>>, vector<1x1x1x16xf32>
    %312 = vector.shape_cast %311 : vector<1x1x1x16xf32> to vector<1x16xf32>
    %313 = arith.subf %310, %312 : vector<1x16xf32>
    %314 = math.absf %313 : vector<1x16xf32>
    %315 = vector.extract_strided_slice %239 {offsets = [1, 7, 0], sizes = [1, 1, 16], strides = [1, 1, 1]} : vector<3x8x16xf32> to vector<1x1x16xf32>
    %316 = vector.shape_cast %315 : vector<1x1x16xf32> to vector<1x16xf32>
    %c0_131 = arith.constant 0 : index
    %c1 = arith.constant 1 : index
    %c0_132 = arith.constant 0 : index
    %c0_133 = arith.constant 0 : index
    %317 = vector.load %arg9[%c0_131, %c1, %c0_132, %c0_133] : memref<1x3x8x16xf32, #tpu.memory_space<vmem>>, vector<1x1x1x16xf32>
    %318 = vector.shape_cast %317 : vector<1x1x1x16xf32> to vector<1x16xf32>
    %319 = arith.subf %316, %318 : vector<1x16xf32>
    %320 = math.absf %319 : vector<1x16xf32>
    %321 = arith.addf %314, %320 : vector<1x16xf32>
    %322 = vector.extract_strided_slice %239 {offsets = [2, 7, 0], sizes = [1, 1, 16], strides = [1, 1, 1]} : vector<3x8x16xf32> to vector<1x1x16xf32>
    %323 = vector.shape_cast %322 : vector<1x1x16xf32> to vector<1x16xf32>
    %c0_134 = arith.constant 0 : index
    %c2 = arith.constant 2 : index
    %c0_135 = arith.constant 0 : index
    %c0_136 = arith.constant 0 : index
    %324 = vector.load %arg9[%c0_134, %c2, %c0_135, %c0_136] : memref<1x3x8x16xf32, #tpu.memory_space<vmem>>, vector<1x1x1x16xf32>
    %325 = vector.shape_cast %324 : vector<1x1x1x16xf32> to vector<1x16xf32>
    %326 = arith.subf %323, %325 : vector<1x16xf32>
    %327 = math.absf %326 : vector<1x16xf32>
    %328 = arith.addf %321, %327 : vector<1x16xf32>
    %cst_137 = arith.constant -3.33333325 : f32
    %329 = vector.broadcast %cst_137 : f32 to vector<1x16xf32>
    %330 = arith.mulf %329, %328 : vector<1x16xf32>
    %331 = math.exp %330 : vector<1x16xf32>
    %332 = arith.mulf %308, %331 : vector<1x16xf32>
    %333 = vector.shape_cast %332 : vector<1x16xf32> to vector<1x1x16xf32>
    %cst_138 = arith.constant dense<0.000000e+00> : vector<1xf32>
    %334 = vector.multi_reduction <add>, %333, %cst_138 [1, 2] : vector<1x1x16xf32> to vector<1xf32>
    %335 = vector.shape_cast %334 : vector<1xf32> to vector<1x1x1xf32>
    %336 = vector.extract %335[0, 0, 0] : f32 from vector<1x1x1xf32>
    %cst_139 = arith.constant 0.000000e+00 : f32
    %337 = arith.select %1, %cst_139, %336 : f32
    %338 = arith.addf %303, %337 : f32
    %339 = tpu.iota {dimensions = array<i32: 1>} : vector<8x128xi32>
    %c0_i32_140 = arith.constant 0 : i32
    %340 = vector.broadcast %c0_i32_140 : i32 to vector<8x128xi32>
    %341 = arith.cmpi eq, %339, %340 : vector<8x128xi32>
    %342 = arith.extui %341 : vector<8x128xi1> to vector<8x128xi32>
    %343 = arith.sitofp %342 : vector<8x128xi32> to vector<8x128xf32>
    %344 = vector.broadcast %47 : f32 to vector<8x128xf32>
    %345 = arith.mulf %344, %343 : vector<8x128xf32>
    %c1_i32_141 = arith.constant 1 : i32
    %346 = vector.broadcast %c1_i32_141 : i32 to vector<8x128xi32>
    %347 = arith.cmpi eq, %339, %346 : vector<8x128xi32>
    %348 = arith.extui %347 : vector<8x128xi1> to vector<8x128xi32>
    %349 = arith.sitofp %348 : vector<8x128xi32> to vector<8x128xf32>
    %350 = vector.broadcast %51 : f32 to vector<8x128xf32>
    %351 = arith.mulf %350, %349 : vector<8x128xf32>
    %352 = arith.addf %345, %351 : vector<8x128xf32>
    %c2_i32_142 = arith.constant 2 : i32
    %353 = vector.broadcast %c2_i32_142 : i32 to vector<8x128xi32>
    %354 = arith.cmpi eq, %339, %353 : vector<8x128xi32>
    %355 = arith.extui %354 : vector<8x128xi1> to vector<8x128xi32>
    %356 = arith.sitofp %355 : vector<8x128xi32> to vector<8x128xf32>
    %357 = vector.broadcast %237 : f32 to vector<8x128xf32>
    %358 = arith.mulf %357, %356 : vector<8x128xf32>
    %359 = arith.addf %352, %358 : vector<8x128xf32>
    %c3_i32 = arith.constant 3 : i32
    %360 = vector.broadcast %c3_i32 : i32 to vector<8x128xi32>
    %361 = arith.cmpi eq, %339, %360 : vector<8x128xi32>
    %362 = arith.extui %361 : vector<8x128xi1> to vector<8x128xi32>
    %363 = arith.sitofp %362 : vector<8x128xi32> to vector<8x128xf32>
    %364 = vector.broadcast %271 : f32 to vector<8x128xf32>
    %365 = arith.mulf %364, %363 : vector<8x128xf32>
    %366 = arith.addf %359, %365 : vector<8x128xf32>
    %c4_i32 = arith.constant 4 : i32
    %367 = vector.broadcast %c4_i32 : i32 to vector<8x128xi32>
    %368 = arith.cmpi eq, %339, %367 : vector<8x128xi32>
    %369 = arith.extui %368 : vector<8x128xi1> to vector<8x128xi32>
    %370 = arith.sitofp %369 : vector<8x128xi32> to vector<8x128xf32>
    %371 = vector.broadcast %338 : f32 to vector<8x128xf32>
    %372 = arith.mulf %371, %370 : vector<8x128xf32>
    %373 = arith.addf %366, %372 : vector<8x128xf32>
    %c0_143 = arith.constant 0 : index
    %c0_144 = arith.constant 0 : index
    %c0_145 = arith.constant 0 : index
    %c0_146 = arith.constant 0 : index
    %374 = vector.load %arg10[%c0_143, %c0_144, %c0_145, %c0_146] : memref<1x1x8x128xf32, #tpu.memory_space<vmem>>, vector<1x1x8x128xf32>
    %375 = vector.shape_cast %374 : vector<1x1x8x128xf32> to vector<8x128xf32>
    %376 = vector.shape_cast %373 : vector<8x128xf32> to vector<1x1x8x128xf32>
    tpu.vector_store %arg10[%c0_143, %c0_144, %c0_145, %c0_146], %376 {strides = array<i32>} : memref<1x1x8x128xf32, #tpu.memory_space<vmem>>, vector<1x1x8x128xf32>,
    return
  }
  func.func @transform_0(%arg0: i32, %arg1: i32) -> (i32, i32, i32) {
    %c0_i32 = arith.constant 0 : i32
    %c0_i32_0 = arith.constant 0 : i32
    return %arg0, %arg1, %c0_i32 : i32, i32, i32
  }
  func.func @transform_1(%arg0: i32, %arg1: i32) -> (i32, i32, i32) {
    %c0_i32 = arith.constant 0 : i32
    %c0_i32_0 = arith.constant 0 : i32
    return %arg0, %arg1, %c0_i32 : i32, i32, i32
  }
  func.func @transform_2(%arg0: i32, %arg1: i32) -> (i32, i32, i32, i32) {
    %c0_i32 = arith.constant 0 : i32
    %c0_i32_0 = arith.constant 0 : i32
    %c0_i32_1 = arith.constant 0 : i32
    return %arg0, %c0_i32, %arg1, %c0_i32_0 : i32, i32, i32, i32
  }
  func.func @transform_3(%arg0: i32, %arg1: i32) -> (i32, i32, i32) {
    %c1_i32 = arith.constant 1 : i32
    %0 = arith.muli %arg1, %c1_i32 : i32
    %c1_i32_0 = arith.constant 1 : i32
    %1 = arith.subi %0, %c1_i32_0 : i32
    %c0_i32 = arith.constant 0 : i32
    %2 = arith.maxsi %1, %c0_i32 : i32
    %c0_i32_1 = arith.constant 0 : i32
    %c0_i32_2 = arith.constant 0 : i32
    return %arg0, %2, %c0_i32_1 : i32, i32, i32
  }
  func.func @transform_4(%arg0: i32, %arg1: i32) -> (i32, i32, i32) {
    %c1_i32 = arith.constant 1 : i32
    %0 = arith.addi %arg1, %c1_i32 : i32
    %c1_i32_0 = arith.constant 1 : i32
    %1 = arith.muli %0, %c1_i32_0 : i32
    %c1_i32_1 = arith.constant 1 : i32
    %2 = arith.minsi %1, %c1_i32_1 : i32
    %c0_i32 = arith.constant 0 : i32
    %c0_i32_2 = arith.constant 0 : i32
    return %arg0, %2, %c0_i32 : i32, i32, i32
  }
  func.func @transform_5(%arg0: i32, %arg1: i32) -> (i32, i32, i32) {
    %c1_i32 = arith.constant 1 : i32
    %0 = arith.muli %arg1, %c1_i32 : i32
    %c1_i32_0 = arith.constant 1 : i32
    %1 = arith.subi %0, %c1_i32_0 : i32
    %c0_i32 = arith.constant 0 : i32
    %2 = arith.maxsi %1, %c0_i32 : i32
    %c0_i32_1 = arith.constant 0 : i32
    %c0_i32_2 = arith.constant 0 : i32
    return %arg0, %2, %c0_i32_1 : i32, i32, i32
  }
  func.func @transform_6(%arg0: i32, %arg1: i32) -> (i32, i32, i32) {
    %c1_i32 = arith.constant 1 : i32
    %0 = arith.addi %arg1, %c1_i32 : i32
    %c1_i32_0 = arith.constant 1 : i32
    %1 = arith.muli %0, %c1_i32_0 : i32
    %c1_i32_1 = arith.constant 1 : i32
    %2 = arith.minsi %1, %c1_i32_1 : i32
    %c0_i32 = arith.constant 0 : i32
    %c0_i32_2 = arith.constant 0 : i32
    return %arg0, %2, %c0_i32 : i32, i32, i32
  }
  func.func @transform_7(%arg0: i32, %arg1: i32) -> (i32, i32, i32, i32) {
    %c1_i32 = arith.constant 1 : i32
    %0 = arith.addi %arg1, %c1_i32 : i32
    %c1_i32_0 = arith.constant 1 : i32
    %1 = arith.muli %0, %c1_i32_0 : i32
    %c1_i32_1 = arith.constant 1 : i32
    %2 = arith.minsi %1, %c1_i32_1 : i32
    %c0_i32 = arith.constant 0 : i32
    %c0_i32_2 = arith.constant 0 : i32
    %c0_i32_3 = arith.constant 0 : i32
    return %arg0, %c0_i32, %2, %c0_i32_2 : i32, i32, i32, i32
  }
  func.func @transform_8(%arg0: i32, %arg1: i32) -> (i32, i32, i32, i32) {
    %c0_i32 = arith.constant 0 : i32
    %c0_i32_0 = arith.constant 0 : i32
    %c0_i32_1 = arith.constant 0 : i32
    return %arg0, %arg1, %c0_i32, %c0_i32_0 : i32, i32, i32, i32
  }
}

</mosaic_0001>

<llo_original>
// kernel: tpu_custom_call.1
$region0: #{tpu_custom_call.1}
  #allocation0 [shape = 'u32[]', space=smem, size = 0x4, offset = 0x4, fixed_abs, tag = 'smem constant byte address 0x4 - core index']
  #allocation1 [shape = 'u32[144,128]{1,0:T(1,128)}', space=vmem, size = 0x12000, scoped, tag = 'internal scratch']
  #allocation2 [shape = 'f32[16,128]{1,0:T(8,128)}', space=vmem, size = 0x2000, scoped, tag = 'scratch operand']
  #allocation3 [shape = 'f32[16,128]{1,0:T(8,128)}', space=vmem, size = 0x2000, scoped, tag = 'scratch operand']
  %s0 = inlined_call_operand.hbm [shape: f32[2,16,16], index: 0, kind: input, shape index: {}]
  %s1 = inlined_call_operand.hbm [shape: f32[2,16,16], index: 1, kind: input, shape index: {}]
  %s2 = inlined_call_operand.hbm [shape: f32[2,3,16,16], index: 2, kind: input, shape index: {}]
  %s3 = inlined_call_operand.hbm [shape: f32[2,16,16], index: 3, kind: input, shape index: {}]
  %s4 = inlined_call_operand.hbm [shape: f32[2,16,16], index: 4, kind: input, shape index: {}]
  %s5 = inlined_call_operand.hbm [shape: f32[2,16,16], index: 5, kind: input, shape index: {}]
  %s6 = inlined_call_operand.hbm [shape: f32[2,16,16], index: 6, kind: input, shape index: {}]
  %s7 = inlined_call_operand.hbm [shape: f32[2,3,16,16], index: 7, kind: input, shape index: {}]
  %s8 = inlined_call_operand.hbm [shape: f32[2,2,8,128], index: 8, kind: output, shape index: {}]
  %s9 = sld [smem:[#allocation0]]
  $region97: #{tpu_custom_call.1} parent=0
    _
  %s11 = ssub.s32 1, %s9
  %s12 = scalar_select 0, %s11, %s9
  $region1: #{tpu_custom_call.1} parent=0
    #allocation4 [shape = 'u8[8192]{0}', space=vmem, size = 0x2000, scoped, tag = 'input window, operand 0']
    #allocation5 [shape = 's32[2]{0}', space=sflag, size = 0x8, scoped, tag = 'scoped memory for tpu_custom_call.1']
    #allocation6 [shape = 's32[2]{0}', space=sflag, size = 0x8, scoped, tag = 'scoped memory for tpu_custom_call.1']
    #allocation7 [shape = 'u8[8192]{0}', space=vmem, size = 0x2000, scoped, tag = 'input window, operand 1']
    #allocation8 [shape = 's32[2]{0}', space=sflag, size = 0x8, scoped, tag = 'scoped memory for tpu_custom_call.1']
    #allocation9 [shape = 'u8[24576]{0}', space=vmem, size = 0x6000, scoped, tag = 'input window, operand 2']
    #allocation10 [shape = 'u8[8192]{0}', space=vmem, size = 0x2000, scoped, tag = 'input window, operand 3']
    #allocation11 [shape = 's32[2]{0}', space=sflag, size = 0x8, scoped, tag = 'scoped memory for tpu_custom_call.1']
    #allocation12 [shape = 'u8[8192]{0}', space=vmem, size = 0x2000, scoped, tag = 'input window, operand 4']
    #allocation13 [shape = 'u8[8192]{0}', space=vmem, size = 0x2000, scoped, tag = 'input window, operand 5']
    #allocation14 [shape = 's32[2]{0}', space=sflag, size = 0x8, scoped, tag = 'scoped memory for tpu_custom_call.1']
    #allocation15 [shape = 'u8[8192]{0}', space=vmem, size = 0x2000, scoped, tag = 'input window, operand 6']
    #allocation16 [shape = 'u8[24576]{0}', space=vmem, size = 0x6000, scoped, tag = 'input window, operand 7']
    #allocation17 [shape = 's32[2]{0}', space=sflag, size = 0x8, scoped, tag = 'scoped memory for tpu_custom_call.1']
    #allocation18 [shape = 'u8[8192]{0}', space=vmem, size = 0x2000, scoped, tag = 'output window, operand 0']
    %13 = vsyncpa [#allocation5], 0
    %s14 = scalar_lea.sflag [#allocation5], 1
    %15 = vsyncpa %s14, 0
    %16 = vsyncpa [#allocation8], 0
    %s17 = scalar_lea.sflag [#allocation8], 1
    %18 = vsyncpa %s17, 0
    %19 = vsyncpa [#allocation11], 0
    %s20 = scalar_lea.sflag [#allocation11], 1
    %21 = vsyncpa %s20, 0
    %22 = vsyncpa [#allocation14], 0
    %s23 = scalar_lea.sflag [#allocation14], 1
    %24 = vsyncpa %s23, 0
    %25 = vsyncpa [#allocation17], 0
    %s26 = scalar_lea.sflag [#allocation17], 1
    %27 = vsyncpa %s26, 0
    %28 = vsyncpa [#allocation6], 0
    %s29 = scalar_lea.sflag [#allocation6], 1
    %30 = vsyncpa %s29, 0
    loop: start=0, step=1, limit=6
    $region2: #{tpu_custom_call.1} parent=1 // loop_pre_header
      _
    $region3: #{tpu_custom_call.1} parent=1 // loop_header
      %s32 = sphi 0, %s36
      %p33 = scmp.ge.s32.totalorder %s32, 6
      %s39 = sphi 0, %s51
      %s40 = sphi 0, %s47
      %s41 = sphi 0, %s39
      %s42 = sphi 0, %s40
      %s43 = sphi 0, %s41
      %s44 = sphi 0, %s42
      %s56 = sphi 0, %s58
      %s59 = sphi 0, %s56
      %s60 = sphi 0, %s59
      %s76 = sphi 0, %s60
      %s84 = sphi 0, %s86
      %s87 = sphi 0, %s84
      %s88 = sphi 0, %s87
      %s104 = sphi 0, %s88
      %s112 = sphi 0, %s114
      %s115 = sphi 0, %s112
      %s116 = sphi 0, %s115
      %s132 = sphi 0, %s116
      %s146 = sphi 0, %s148
      %s149 = sphi 0, %s146
      %s150 = sphi 0, %s149
      %s166 = sphi 0, %s150
      %s180 = sphi 0, %s182
      %s183 = sphi 0, %s180
      %s184 = sphi 0, %s183
      %s200 = sphi 0, %s184
      %s214 = sphi 0, %s216
      %s217 = sphi 0, %s214
      %s218 = sphi 0, %s217
      %s234 = sphi 0, %s218
      %s248 = sphi 0, %s250
      %s251 = sphi 0, %s248
      %s252 = sphi 0, %s251
      %s268 = sphi 0, %s252
      %s282 = sphi 0, %s284
      %s285 = sphi 0, %s282
      %s286 = sphi 0, %s285
      %s302 = sphi 0, %s286
      %s310 = sphi 0, %s312
      %s313 = sphi 0, %s310
      %s314 = sphi 0, %s313
      %s330 = sphi 0, %s314
    $region4: #{tpu_custom_call.1} parent=1 // loop_header_branch
      %35 = sbr.rel (%p33) target = $region8
    $region5: #{tpu_custom_call.1} parent=1 // loop_body
      %s37 = ssub.s32 %s32, 1
      %s38 = ssub.s32 %s32, 2
      %s45 = sadd.s32 1, %s40
      %p46 = scmp.ge.s32.totalorder %s45, 2
      %s47 = scalar_select %p46, 0, %s45
      %s48 = sadd.s32 1, %s39
      %s49 = scalar_select %p46, %s48, %s39
      %p50 = scmp.ge.s32.totalorder %s49, 2
      %s51 = scalar_select %p50, 0, %s49
      %s52 = ssub.s32 %s39, %s51
      %s53 = ssub.s32 %s40, %s47
      %s54 = sor.u32 %s52, %s53
      %p55 = scmp.eq.s32.totalorder %s54, 0
      %s57 = sadd.s32 %s56, 1
      %s58 = scalar_select %p55, %s56, %s57
      %p61 = pneg %p55
      %p62 = scmp.eq.s32.totalorder %s32, 3
      %p63 = por %p61, %p62
      %p64 = scmp.ne.s32.totalorder %s56, %s59
      %p65 = scmp.eq.s32.totalorder %s32, 0
      %p66 = por %p64, %p65
      %p67 = scmp.ne.s32.totalorder %s56, %s59
      %p68 = scmp.eq.s32.totalorder %s37, 3
      %p69 = por %p67, %p68
      %p70 = scmp.ne.s32.totalorder %s59, %s60
      %p71 = scmp.eq.s32.totalorder %s37, 0
      %p72 = por %p70, %p71
      %p73 = scmp.ne.s32.totalorder %s59, %s60
      %p74 = scmp.eq.s32.totalorder %s38, 3
      %p75 = por %p73, %p74
      %p77 = scmp.ne.s32.totalorder %s60, %s76
      %p78 = scmp.eq.s32.totalorder %s38, 0
      %p79 = por %p77, %p78
      %s80 = ssub.s32 %s39, %s51
      %s81 = ssub.s32 %s40, %s47
      %s82 = sor.u32 %s80, %s81
      %p83 = scmp.eq.s32.totalorder %s82, 0
      %s85 = sadd.s32 %s84, 1
      %s86 = scalar_select %p83, %s84, %s85
      %p89 = pneg %p83
      %p90 = scmp.eq.s32.totalorder %s32, 3
      %p91 = por %p89, %p90
      %p92 = scmp.ne.s32.totalorder %s84, %s87
      %p93 = scmp.eq.s32.totalorder %s32, 0
      %p94 = por %p92, %p93
      %p95 = scmp.ne.s32.totalorder %s84, %s87
      %p96 = scmp.eq.s32.totalorder %s37, 3
      %p97 = por %p95, %p96
      %p98 = scmp.ne.s32.totalorder %s87, %s88
      %p99 = scmp.eq.s32.totalorder %s37, 0
      %p100 = por %p98, %p99
      %p101 = scmp.ne.s32.totalorder %s87, %s88
      %p102 = scmp.eq.s32.totalorder %s38, 3
      %p103 = por %p101, %p102
      %p105 = scmp.ne.s32.totalorder %s88, %s104
      %p106 = scmp.eq.s32.totalorder %s38, 0
      %p107 = por %p105, %p106
      %s108 = ssub.s32 %s39, %s51
      %s109 = ssub.s32 %s40, %s47
      %s110 = sor.u32 %s108, %s109
      %p111 = scmp.eq.s32.totalorder %s110, 0
      %s113 = sadd.s32 %s112, 1
      %s114 = scalar_select %p111, %s112, %s113
      %p117 = pneg %p111
      %p118 = scmp.eq.s32.totalorder %s32, 3
      %p119 = por %p117, %p118
      %p120 = scmp.ne.s32.totalorder %s112, %s115
      %p121 = scmp.eq.s32.totalorder %s32, 0
      %p122 = por %p120, %p121
      %p123 = scmp.ne.s32.totalorder %s112, %s115
      %p124 = scmp.eq.s32.totalorder %s37, 3
      %p125 = por %p123, %p124
      %p126 = scmp.ne.s32.totalorder %s115, %s116
      %p127 = scmp.eq.s32.totalorder %s37, 0
      %p128 = por %p126, %p127
      %p129 = scmp.ne.s32.totalorder %s115, %s116
      %p130 = scmp.eq.s32.totalorder %s38, 3
      %p131 = por %p129, %p130
      %p133 = scmp.ne.s32.totalorder %s116, %s132
      %p134 = scmp.eq.s32.totalorder %s38, 0
      %p135 = por %p133, %p134
      %s136 = ssub.s32 %s40, 1
      %p137 = scmp.gt.s32.totalorder %s136, 0
      %s138 = scalar_select %p137, %s136, 0
      %s139 = ssub.s32 %s47, 1
      %p140 = scmp.gt.s32.totalorder %s139, 0
      %s141 = scalar_select %p140, %s139, 0
      %s142 = ssub.s32 %s39, %s51
      %s143 = ssub.s32 %s138, %s141
      %s144 = sor.u32 %s142, %s143
      %p145 = scmp.eq.s32.totalorder %s144, 0
      %s147 = sadd.s32 %s146, 1
      %s148 = scalar_select %p145, %s146, %s147
      %p151 = pneg %p145
      %p152 = scmp.eq.s32.totalorder %s32, 3
      %p153 = por %p151, %p152
      %p154 = scmp.ne.s32.totalorder %s146, %s149
      %p155 = scmp.eq.s32.totalorder %s32, 0
      %p156 = por %p154, %p155
      %p157 = scmp.ne.s32.totalorder %s146, %s149
      %p158 = scmp.eq.s32.totalorder %s37, 3
      %p159 = por %p157, %p158
      %p160 = scmp.ne.s32.totalorder %s149, %s150
      %p161 = scmp.eq.s32.totalorder %s37, 0
      %p162 = por %p160, %p161
      %p163 = scmp.ne.s32.totalorder %s149, %s150
      %p164 = scmp.eq.s32.totalorder %s38, 3
      %p165 = por %p163, %p164
      %p167 = scmp.ne.s32.totalorder %s150, %s166
      %p168 = scmp.eq.s32.totalorder %s38, 0
      %p169 = por %p167, %p168
      %s170 = sadd.s32 %s40, 1
      %p171 = scmp.lt.s32.totalorder %s170, 1
      %s172 = scalar_select %p171, %s170, 1
      %s173 = sadd.s32 %s47, 1
      %p174 = scmp.lt.s32.totalorder %s173, 1
      %s175 = scalar_select %p174, %s173, 1
      %s176 = ssub.s32 %s39, %s51
      %s177 = ssub.s32 %s172, %s175
      %s178 = sor.u32 %s176, %s177
      %p179 = scmp.eq.s32.totalorder %s178, 0
      %s181 = sadd.s32 %s180, 1
      %s182 = scalar_select %p179, %s180, %s181
      %p185 = pneg %p179
      %p186 = scmp.eq.s32.totalorder %s32, 3
      %p187 = por %p185, %p186
      %p188 = scmp.ne.s32.totalorder %s180, %s183
      %p189 = scmp.eq.s32.totalorder %s32, 0
      %p190 = por %p188, %p189
      %p191 = scmp.ne.s32.totalorder %s180, %s183
      %p192 = scmp.eq.s32.totalorder %s37, 3
      %p193 = por %p191, %p192
      %p194 = scmp.ne.s32.totalorder %s183, %s184
      %p195 = scmp.eq.s32.totalorder %s37, 0
      %p196 = por %p194, %p195
      %p197 = scmp.ne.s32.totalorder %s183, %s184
      %p198 = scmp.eq.s32.totalorder %s38, 3
      %p199 = por %p197, %p198
      %p201 = scmp.ne.s32.totalorder %s184, %s200
      %p202 = scmp.eq.s32.totalorder %s38, 0
      %p203 = por %p201, %p202
      %s204 = ssub.s32 %s40, 1
      %p205 = scmp.gt.s32.totalorder %s204, 0
      %s206 = scalar_select %p205, %s204, 0
      %s207 = ssub.s32 %s47, 1
      %p208 = scmp.gt.s32.totalorder %s207, 0
      %s209 = scalar_select %p208, %s207, 0
      %s210 = ssub.s32 %s39, %s51
      %s211 = ssub.s32 %s206, %s209
      %s212 = sor.u32 %s210, %s211
      %p213 = scmp.eq.s32.totalorder %s212, 0
      %s215 = sadd.s32 %s214, 1
      %s216 = scalar_select %p213, %s214, %s215
      %p219 = pneg %p213
      %p220 = scmp.eq.s32.totalorder %s32, 3
      %p221 = por %p219, %p220
      %p222 = scmp.ne.s32.totalorder %s214, %s217
      %p223 = scmp.eq.s32.totalorder %s32, 0
      %p224 = por %p222, %p223
      %p225 = scmp.ne.s32.totalorder %s214, %s217
      %p226 = scmp.eq.s32.totalorder %s37, 3
      %p227 = por %p225, %p226
      %p228 = scmp.ne.s32.totalorder %s217, %s218
      %p229 = scmp.eq.s32.totalorder %s37, 0
      %p230 = por %p228, %p229
      %p231 = scmp.ne.s32.totalorder %s217, %s218
      %p232 = scmp.eq.s32.totalorder %s38, 3
      %p233 = por %p231, %p232
      %p235 = scmp.ne.s32.totalorder %s218, %s234
      %p236 = scmp.eq.s32.totalorder %s38, 0
      %p237 = por %p235, %p236
      %s238 = sadd.s32 %s40, 1
      %p239 = scmp.lt.s32.totalorder %s238, 1
      %s240 = scalar_select %p239, %s238, 1
      %s241 = sadd.s32 %s47, 1
      %p242 = scmp.lt.s32.totalorder %s241, 1
      %s243 = scalar_select %p242, %s241, 1
      %s244 = ssub.s32 %s39, %s51
      %s245 = ssub.s32 %s240, %s243
      %s246 = sor.u32 %s244, %s245
      %p247 = scmp.eq.s32.totalorder %s246, 0
      %s249 = sadd.s32 %s248, 1
      %s250 = scalar_select %p247, %s248, %s249
      %p253 = pneg %p247
      %p254 = scmp.eq.s32.totalorder %s32, 3
      %p255 = por %p253, %p254
      %p256 = scmp.ne.s32.totalorder %s248, %s251
      %p257 = scmp.eq.s32.totalorder %s32, 0
      %p258 = por %p256, %p257
      %p259 = scmp.ne.s32.totalorder %s248, %s251
      %p260 = scmp.eq.s32.totalorder %s37, 3
      %p261 = por %p259, %p260
      %p262 = scmp.ne.s32.totalorder %s251, %s252
      %p263 = scmp.eq.s32.totalorder %s37, 0
      %p264 = por %p262, %p263
      %p265 = scmp.ne.s32.totalorder %s251, %s252
      %p266 = scmp.eq.s32.totalorder %s38, 3
      %p267 = por %p265, %p266
      %p269 = scmp.ne.s32.totalorder %s252, %s268
      %p270 = scmp.eq.s32.totalorder %s38, 0
      %p271 = por %p269, %p270
      %s272 = sadd.s32 %s40, 1
      %p273 = scmp.lt.s32.totalorder %s272, 1
      %s274 = scalar_select %p273, %s272, 1
      %s275 = sadd.s32 %s47, 1
      %p276 = scmp.lt.s32.totalorder %s275, 1
      %s277 = scalar_select %p276, %s275, 1
      %s278 = ssub.s32 %s39, %s51
      %s279 = ssub.s32 %s274, %s277
      %s280 = sor.u32 %s278, %s279
      %p281 = scmp.eq.s32.totalorder %s280, 0
      %s283 = sadd.s32 %s282, 1
      %s284 = scalar_select %p281, %s282, %s283
      %p287 = pneg %p281
      %p288 = scmp.eq.s32.totalorder %s32, 3
      %p289 = por %p287, %p288
      %p290 = scmp.ne.s32.totalorder %s282, %s285
      %p291 = scmp.eq.s32.totalorder %s32, 0
      %p292 = por %p290, %p291
      %p293 = scmp.ne.s32.totalorder %s282, %s285
      %p294 = scmp.eq.s32.totalorder %s37, 3
      %p295 = por %p293, %p294
      %p296 = scmp.ne.s32.totalorder %s285, %s286
      %p297 = scmp.eq.s32.totalorder %s37, 0
      %p298 = por %p296, %p297
      %p299 = scmp.ne.s32.totalorder %s285, %s286
      %p300 = scmp.eq.s32.totalorder %s38, 3
      %p301 = por %p299, %p300
      %p303 = scmp.ne.s32.totalorder %s286, %s302
      %p304 = scmp.eq.s32.totalorder %s38, 0
      %p305 = por %p303, %p304
      %s306 = ssub.s32 %s39, %s51
      %s307 = ssub.s32 %s40, %s47
      %s308 = sor.u32 %s306, %s307
      %p309 = scmp.eq.s32.totalorder %s308, 0
      %s311 = sadd.s32 %s310, 1
      %s312 = scalar_select %p309, %s310, %s311
      %p315 = pneg %p309
      %p316 = scmp.eq.s32.totalorder %s32, 3
      %p317 = por %p315, %p316
      %p318 = scmp.ne.s32.totalorder %s310, %s313
      %p319 = scmp.eq.s32.totalorder %s32, 0
      %p320 = por %p318, %p319
      %p321 = scmp.ne.s32.totalorder %s310, %s313
      %p322 = scmp.eq.s32.totalorder %s37, 3
      %p323 = por %p321, %p322
      %p324 = scmp.ne.s32.totalorder %s313, %s314
      %p325 = scmp.eq.s32.totalorder %s37, 0
      %p326 = por %p324, %p325
      %p327 = scmp.ne.s32.totalorder %s313, %s314
      %p328 = scmp.eq.s32.totalorder %s38, 3
      %p329 = por %p327, %p328
      %p331 = scmp.ne.s32.totalorder %s314, %s330
      %p332 = scmp.eq.s32.totalorder %s38, 0
      %p333 = por %p331, %p332
      %p334 = scmp.le.s32.totalorder 1, %s32
      %p335 = scmp.lt.s32.totalorder %s32, 5
      %p336 = pnand %p334, %p335
      %p337 = pneg %p336
      // Predicated region
      $region9: #{tpu_custom_call.1} parent=5 // pred_check
        _
      $region10: #{tpu_custom_call.1} parent=5 // pred_check_branch
        %339 = sbr.rel (%p336) target = $region12
      $region11: #{tpu_custom_call.1} parent=5 // pred_region
        %s340 = ssub.s32 %s32, 1
      $region12: #{tpu_custom_call.1} parent=5 // pred_fallthru
        _
      %p341 = scmp.lt.s32.totalorder %s32, 4
      // Predicated region
      $region13: #{tpu_custom_call.1} parent=5 // pred_check
        %p342 = pneg %p341
      $region14: #{tpu_custom_call.1} parent=5 // pred_check_branch
        %344 = sbr.rel (%p342) target = $region16
      $region15: #{tpu_custom_call.1} parent=5 // pred_region
        // Predicated region
        $region17: #{tpu_custom_call.1} parent=15 // pred_check
          %p345 = pneg %p66
        $region18: #{tpu_custom_call.1} parent=15 // pred_check_branch
          %347 = sbr.rel (%p345) target = $region20
        $region19: #{tpu_custom_call.1} parent=15 // pred_region
          %s348 = sand.u32 %s56, 1
          %s349 = scalar_lea.sflag [#allocation5], %s348
          %s350 = sand.u32 %s56, 1
          %s351 = smul.addr %s350, 8
          %s352 = scalar_lea.vmem [#allocation4], %s351
          %s354 = ssub.s32 128, 128
          %355 = vsyncadd %s349, %s354
          %s356 = smul.addr %s39, 2
          %s357 = sadd.s32 %s40, %s356
          %s358 = smul.addr %s357, 128
          %s359 = scalar_lea.hbm %s0, %s358
          %s361 = sshll.u32 %s352, 4
          %s362 = int_to_ptr.vmem [resolvable:$true] %s361
          %364 = dma.hbm_to_vmem [thread:$0]  %s359, 128, %s362, %s349
        $region20: #{tpu_custom_call.1} parent=15 // pred_fallthru
          _
        // Predicated region
        $region21: #{tpu_custom_call.1} parent=15 // pred_check
          %p365 = pneg %p94
        $region22: #{tpu_custom_call.1} parent=15 // pred_check_branch
          %367 = sbr.rel (%p365) target = $region24
        $region23: #{tpu_custom_call.1} parent=15 // pred_region
          %s368 = sand.u32 %s32, 1
          %s369 = scalar_lea.sflag [#allocation8], %s368
          %s370 = sand.u32 %s84, 1
          %s371 = smul.addr %s370, 8
          %s372 = scalar_lea.vmem [#allocation7], %s371
          %s374 = ssub.s32 128, 128
          %375 = vsyncadd %s369, %s374
          %s376 = smul.addr %s39, 2
          %s377 = sadd.s32 %s40, %s376
          %s378 = smul.addr %s377, 128
          %s379 = scalar_lea.hbm %s1, %s378
          %s381 = sshll.u32 %s372, 4
          %s382 = int_to_ptr.vmem [resolvable:$true] %s381
          %384 = dma.hbm_to_vmem [thread:$0]  %s379, 128, %s382, %s369
        $region24: #{tpu_custom_call.1} parent=15 // pred_fallthru
          _
        // Predicated region
        $region25: #{tpu_custom_call.1} parent=15 // pred_check
          %p385 = pneg %p122
        $region26: #{tpu_custom_call.1} parent=15 // pred_check_branch
          %387 = sbr.rel (%p385) target = $region28
        $region27: #{tpu_custom_call.1} parent=15 // pred_region
          %s388 = sand.u32 %s32, 1
          %s389 = scalar_lea.sflag [#allocation8], %s388
          %s390 = sand.u32 %s112, 1
          %s391 = smul.addr %s390, 24
          %s392 = scalar_lea.vmem [#allocation9], %s391
          %s394 = ssub.s32 384, 384
          %395 = vsyncadd %s389, %s394
          %s396 = smul.addr %s39, 6
          %s397 = sadd.s32 %s40, %s396
          %s398 = smul.addr %s397, 128
          %s399 = scalar_lea.hbm %s2, %s398
          %s400 = sshll.u32 %s392, 4
          %s401 = int_to_ptr.vmem [resolvable:$true] %s400
          %406 = dma.hbm_to_vmem [thread:$0]  %s399, 384, %s401, %s389, 256, 128, 8
        $region28: #{tpu_custom_call.1} parent=15 // pred_fallthru
          _
        // Predicated region
        $region29: #{tpu_custom_call.1} parent=15 // pred_check
          %p407 = pneg %p156
        $region30: #{tpu_custom_call.1} parent=15 // pred_check_branch
          %409 = sbr.rel (%p407) target = $region32
        $region31: #{tpu_custom_call.1} parent=15 // pred_region
          %s410 = sand.u32 %s32, 1
          %s411 = scalar_lea.sflag [#allocation11], %s410
          %s412 = sand.u32 %s146, 1
          %s413 = smul.addr %s412, 8
          %s414 = scalar_lea.vmem [#allocation10], %s413
          %s415 = ssub.s32 %s40, 1
          %p416 = scmp.gt.s32.totalorder %s415, 0
          %s417 = scalar_select %p416, %s415, 0
          %s419 = ssub.s32 128, 128
          %420 = vsyncadd %s411, %s419
          %s421 = smul.addr %s39, 2
          %s422 = sadd.s32 %s417, %s421
          %s423 = smul.addr %s422, 128
          %s424 = scalar_lea.hbm %s3, %s423
          %s426 = sshll.u32 %s414, 4
          %s427 = int_to_ptr.vmem [resolvable:$true] %s426
          %429 = dma.hbm_to_vmem [thread:$0]  %s424, 128, %s427, %s411
        $region32: #{tpu_custom_call.1} parent=15 // pred_fallthru
          _
        // Predicated region
        $region33: #{tpu_custom_call.1} parent=15 // pred_check
          %p430 = pneg %p190
        $region34: #{tpu_custom_call.1} parent=15 // pred_check_branch
          %432 = sbr.rel (%p430) target = $region36
        $region35: #{tpu_custom_call.1} parent=15 // pred_region
          %s433 = sand.u32 %s32, 1
          %s434 = scalar_lea.sflag [#allocation11], %s433
          %s435 = sand.u32 %s180, 1
          %s436 = smul.addr %s435, 8
          %s437 = scalar_lea.vmem [#allocation12], %s436
          %s438 = sadd.s32 %s40, 1
          %p439 = scmp.lt.s32.totalorder %s438, 1
          %s440 = scalar_select %p439, %s438, 1
          %s442 = ssub.s32 128, 128
          %443 = vsyncadd %s434, %s442
          %s444 = smul.addr %s39, 2
          %s445 = sadd.s32 %s440, %s444
          %s446 = smul.addr %s445, 128
          %s447 = scalar_lea.hbm %s4, %s446
          %s449 = sshll.u32 %s437, 4
          %s450 = int_to_ptr.vmem [resolvable:$true] %s449
          %452 = dma.hbm_to_vmem [thread:$0]  %s447, 128, %s450, %s434
        $region36: #{tpu_custom_call.1} parent=15 // pred_fallthru
          _
        // Predicated region
        $region37: #{tpu_custom_call.1} parent=15 // pred_check
          %p453 = pneg %p224
        $region38: #{tpu_custom_call.1} parent=15 // pred_check_branch
          %455 = sbr.rel (%p453) target = $region40
        $region39: #{tpu_custom_call.1} parent=15 // pred_region
          %s456 = sand.u32 %s32, 1
          %s457 = scalar_lea.sflag [#allocation14], %s456
          %s458 = sand.u32 %s214, 1
          %s459 = smul.addr %s458, 8
          %s460 = scalar_lea.vmem [#allocation13], %s459
          %s461 = ssub.s32 %s40, 1
          %p462 = scmp.gt.s32.totalorder %s461, 0
          %s463 = scalar_select %p462, %s461, 0
          %s465 = ssub.s32 128, 128
          %466 = vsyncadd %s457, %s465
          %s467 = smul.addr %s39, 2
          %s468 = sadd.s32 %s463, %s467
          %s469 = smul.addr %s468, 128
          %s470 = scalar_lea.hbm %s5, %s469
          %s472 = sshll.u32 %s460, 4
          %s473 = int_to_ptr.vmem [resolvable:$true] %s472
          %475 = dma.hbm_to_vmem [thread:$0]  %s470, 128, %s473, %s457
        $region40: #{tpu_custom_call.1} parent=15 // pred_fallthru
          _
        // Predicated region
        $region41: #{tpu_custom_call.1} parent=15 // pred_check
          %p476 = pneg %p258
        $region42: #{tpu_custom_call.1} parent=15 // pred_check_branch
          %478 = sbr.rel (%p476) target = $region44
        $region43: #{tpu_custom_call.1} parent=15 // pred_region
          %s479 = sand.u32 %s32, 1
          %s480 = scalar_lea.sflag [#allocation14], %s479
          %s481 = sand.u32 %s248, 1
          %s482 = smul.addr %s481, 8
          %s483 = scalar_lea.vmem [#allocation15], %s482
          %s484 = sadd.s32 %s40, 1
          %p485 = scmp.lt.s32.totalorder %s484, 1
          %s486 = scalar_select %p485, %s484, 1
          %s488 = ssub.s32 128, 128
          %489 = vsyncadd %s480, %s488
          %s490 = smul.addr %s39, 2
          %s491 = sadd.s32 %s486, %s490
          %s492 = smul.addr %s491, 128
          %s493 = scalar_lea.hbm %s6, %s492
          %s495 = sshll.u32 %s483, 4
          %s496 = int_to_ptr.vmem [resolvable:$true] %s495
          %498 = dma.hbm_to_vmem [thread:$0]  %s493, 128, %s496, %s480
        $region44: #{tpu_custom_call.1} parent=15 // pred_fallthru
          _
        // Predicated region
        $region45: #{tpu_custom_call.1} parent=15 // pred_check
          %p499 = pneg %p292
        $region46: #{tpu_custom_call.1} parent=15 // pred_check_branch
          %501 = sbr.rel (%p499) target = $region48
        $region47: #{tpu_custom_call.1} parent=15 // pred_region
          %s502 = sand.u32 %s282, 1
          %s503 = scalar_lea.sflag [#allocation17], %s502
          %s504 = sand.u32 %s282, 1
          %s505 = smul.addr %s504, 24
          %s506 = scalar_lea.vmem [#allocation16], %s505
          %s507 = sadd.s32 %s40, 1
          %p508 = scmp.lt.s32.totalorder %s507, 1
          %s509 = scalar_select %p508, %s507, 1
          %s511 = ssub.s32 384, 384
          %512 = vsyncadd %s503, %s511
          %s513 = smul.addr %s39, 6
          %s514 = sadd.s32 %s509, %s513
          %s515 = smul.addr %s514, 128
          %s516 = scalar_lea.hbm %s7, %s515
          %s517 = sshll.u32 %s506, 4
          %s518 = int_to_ptr.vmem [resolvable:$true] %s517
          %523 = dma.hbm_to_vmem [thread:$0]  %s516, 384, %s518, %s503, 256, 128, 8
        $region48: #{tpu_custom_call.1} parent=15 // pred_fallthru
          _
      $region16: #{tpu_custom_call.1} parent=5 // pred_fallthru
        _
      %p524 = scmp.le.s32.totalorder 1, %s32
      %p525 = scmp.lt.s32.totalorder %s32, 5
      %p526 = pnand %p524, %p525
      %p527 = pneg %p526
      // Predicated region
      $region49: #{tpu_custom_call.1} parent=5 // pred_check
        _
      $region50: #{tpu_custom_call.1} parent=5 // pred_check_branch
        %529 = sbr.rel (%p526) target = $region52
      $region51: #{tpu_custom_call.1} parent=5 // pred_region
        %s530 = ssub.s32 %s32, 1
        %s531 = sand.u32 %s59, 1
        %s532 = scalar_lea.sflag [#allocation5], %s531
        %s533 = sand.u32 %s59, 1
        %s534 = smul.addr %s533, 8
        %s535 = scalar_lea.vmem [#allocation4], %s534
        // Predicated region
        $region53: #{tpu_custom_call.1} parent=51 // pred_check
          %p536 = pneg %p72
        $region54: #{tpu_custom_call.1} parent=51 // pred_check_branch
          %538 = sbr.rel (%p536) target = $region56
        $region55: #{tpu_custom_call.1} parent=51 // pred_region
          %539 = dma.done %s532, 128
        $region56: #{tpu_custom_call.1} parent=51 // pred_fallthru
          _
        %s540 = sand.u32 %s37, 1
        %s541 = scalar_lea.sflag [#allocation8], %s540
        %s542 = sand.u32 %s87, 1
        %s543 = smul.addr %s542, 8
        %s544 = scalar_lea.vmem [#allocation7], %s543
        // Predicated region
        $region57: #{tpu_custom_call.1} parent=51 // pred_check
          %p545 = pneg %p100
        $region58: #{tpu_custom_call.1} parent=51 // pred_check_branch
          %547 = sbr.rel (%p545) target = $region60
        $region59: #{tpu_custom_call.1} parent=51 // pred_region
          %548 = dma.done %s541, 128
        $region60: #{tpu_custom_call.1} parent=51 // pred_fallthru
          _
        %s549 = sand.u32 %s37, 1
        %s550 = scalar_lea.sflag [#allocation8], %s549
        %s551 = sand.u32 %s115, 1
        %s552 = smul.addr %s551, 24
        %s553 = scalar_lea.vmem [#allocation9], %s552
        // Predicated region
        $region61: #{tpu_custom_call.1} parent=51 // pred_check
          %p554 = pneg %p128
        $region62: #{tpu_custom_call.1} parent=51 // pred_check_branch
          %556 = sbr.rel (%p554) target = $region64
        $region63: #{tpu_custom_call.1} parent=51 // pred_region
          %557 = dma.done %s550, 384
        $region64: #{tpu_custom_call.1} parent=51 // pred_fallthru
          _
        %s558 = sand.u32 %s37, 1
        %s559 = scalar_lea.sflag [#allocation11], %s558
        %s560 = sand.u32 %s149, 1
        %s561 = smul.addr %s560, 8
        %s562 = scalar_lea.vmem [#allocation10], %s561
        // Predicated region
        $region65: #{tpu_custom_call.1} parent=51 // pred_check
          %p563 = pneg %p162
        $region66: #{tpu_custom_call.1} parent=51 // pred_check_branch
          %565 = sbr.rel (%p563) target = $region68
        $region67: #{tpu_custom_call.1} parent=51 // pred_region
          %566 = dma.done %s559, 128
        $region68: #{tpu_custom_call.1} parent=51 // pred_fallthru
          _
        %s567 = sand.u32 %s37, 1
        %s568 = scalar_lea.sflag [#allocation11], %s567
        %s569 = sand.u32 %s183, 1
        %s570 = smul.addr %s569, 8
        %s571 = scalar_lea.vmem [#allocation12], %s570
        // Predicated region
        $region69: #{tpu_custom_call.1} parent=51 // pred_check
          %p572 = pneg %p196
        $region70: #{tpu_custom_call.1} parent=51 // pred_check_branch
          %574 = sbr.rel (%p572) target = $region72
        $region71: #{tpu_custom_call.1} parent=51 // pred_region
          %575 = dma.done %s568, 128
        $region72: #{tpu_custom_call.1} parent=51 // pred_fallthru
          _
        %s576 = sand.u32 %s37, 1
        %s577 = scalar_lea.sflag [#allocation14], %s576
        %s578 = sand.u32 %s217, 1
        %s579 = smul.addr %s578, 8
        %s580 = scalar_lea.vmem [#allocation13], %s579
        // Predicated region
        $region73: #{tpu_custom_call.1} parent=51 // pred_check
          %p581 = pneg %p230
        $region74: #{tpu_custom_call.1} parent=51 // pred_check_branch
          %583 = sbr.rel (%p581) target = $region76
        $region75: #{tpu_custom_call.1} parent=51 // pred_region
          %584 = dma.done %s577, 128
        $region76: #{tpu_custom_call.1} parent=51 // pred_fallthru
          _
        %s585 = sand.u32 %s37, 1
        %s586 = scalar_lea.sflag [#allocation14], %s585
        %s587 = sand.u32 %s251, 1
        %s588 = smul.addr %s587, 8
        %s589 = scalar_lea.vmem [#allocation15], %s588
        // Predicated region
        $region77: #{tpu_custom_call.1} parent=51 // pred_check
          %p590 = pneg %p264
        $region78: #{tpu_custom_call.1} parent=51 // pred_check_branch
          %592 = sbr.rel (%p590) target = $region80
        $region79: #{tpu_custom_call.1} parent=51 // pred_region
          %593 = dma.done %s586, 128
        $region80: #{tpu_custom_call.1} parent=51 // pred_fallthru
          _
        %s594 = sand.u32 %s285, 1
        %s595 = scalar_lea.sflag [#allocation17], %s594
        %s596 = sand.u32 %s285, 1
        %s597 = smul.addr %s596, 24
        %s598 = scalar_lea.vmem [#allocation16], %s597
        // Predicated region
        $region81: #{tpu_custom_call.1} parent=51 // pred_check
          %p599 = pneg %p298
        $region82: #{tpu_custom_call.1} parent=51 // pred_check_branch
          %601 = sbr.rel (%p599) target = $region84
        $region83: #{tpu_custom_call.1} parent=51 // pred_region
          %602 = dma.done %s595, 384
        $region84: #{tpu_custom_call.1} parent=51 // pred_fallthru
          _
        %s603 = sand.u32 %s59, 1
        %s604 = scalar_lea.sflag [#allocation5], %s603
        %s605 = sand.u32 %s59, 1
        %s606 = smul.addr %s605, 8
        %s607 = scalar_lea.vmem [#allocation4], %s606
        %p608 = pneg %p72
        %p609 = pneg %p69
        %s610 = sand.u32 %s37, 1
        %s611 = scalar_lea.sflag [#allocation8], %s610
        %s612 = sand.u32 %s87, 1
        %s613 = smul.addr %s612, 8
        %s614 = scalar_lea.vmem [#allocation7], %s613
        %p615 = pneg %p100
        %p616 = pneg %p97
        %s617 = sand.u32 %s37, 1
        %s618 = scalar_lea.sflag [#allocation8], %s617
        %s619 = sand.u32 %s115, 1
        %s620 = smul.addr %s619, 24
        %s621 = scalar_lea.vmem [#allocation9], %s620
        %p622 = pneg %p128
        %p623 = pneg %p125
        %s624 = sand.u32 %s37, 1
        %s625 = scalar_lea.sflag [#allocation11], %s624
        %s626 = sand.u32 %s149, 1
        %s627 = smul.addr %s626, 8
        %s628 = scalar_lea.vmem [#allocation10], %s627
        %p629 = pneg %p162
        %p630 = pneg %p159
        %s631 = sand.u32 %s37, 1
        %s632 = scalar_lea.sflag [#allocation11], %s631
        %s633 = sand.u32 %s183, 1
        %s634 = smul.addr %s633, 8
        %s635 = scalar_lea.vmem [#allocation12], %s634
        %p636 = pneg %p196
        %p637 = pneg %p193
        %s638 = sand.u32 %s37, 1
        %s639 = scalar_lea.sflag [#allocation14], %s638
        %s640 = sand.u32 %s217, 1
        %s641 = smul.addr %s640, 8
        %s642 = scalar_lea.vmem [#allocation13], %s641
        %p643 = pneg %p230
        %p644 = pneg %p227
        %s645 = sand.u32 %s37, 1
        %s646 = scalar_lea.sflag [#allocation14], %s645
        %s647 = sand.u32 %s251, 1
        %s648 = smul.addr %s647, 8
        %s649 = scalar_lea.vmem [#allocation15], %s648
        %p650 = pneg %p264
        %p651 = pneg %p261
        %s652 = sand.u32 %s285, 1
        %s653 = scalar_lea.sflag [#allocation17], %s652
        %s654 = sand.u32 %s285, 1
        %s655 = smul.addr %s654, 24
        %s656 = scalar_lea.vmem [#allocation16], %s655
        %p657 = pneg %p298
        %p658 = pneg %p295
        %p659 = pneg %p326
        %p660 = pneg %p323
        %s661 = sand.u32 %s313, 1
        %s662 = scalar_lea.sflag [#allocation6], %s661
        %s663 = sand.u32 %s313, 1
        %s664 = smul.addr %s663, 8
        %s665 = scalar_lea.vmem [#allocation18], %s664
        %s666 = ssub.s32 %s42, 1
        %p667 = scmp.gt.s32.totalorder %s666, 0
        %s668 = scalar_select %p667, %s666, 0
        %s669 = sadd.s32 %s42, 1
        %p670 = scmp.lt.s32.totalorder %s669, 1
        %s671 = scalar_select %p670, %s669, 1
        %s672 = ssub.s32 %s42, 1
        %p673 = scmp.gt.s32.totalorder %s672, 0
        %s674 = scalar_select %p673, %s672, 0
        %s675 = sadd.s32 %s42, 1
        %p676 = scmp.lt.s32.totalorder %s675, 1
        %s677 = scalar_select %p676, %s675, 1
        %s678 = sadd.s32 %s42, 1
        %p679 = scmp.lt.s32.totalorder %s678, 1
        %s680 = scalar_select %p679, %s678, 1
        %p681 = scmp.eq.s32.totalorder %s42, 0
        %p682 = scmp.eq.s32.totalorder %s42, 1
        %v683 = vld [vmem:[%s535] sm:$0xff]
        %v684 = vld [vmem:[%s544] sm:$0xff]
        %685 = vst [vmem:[#allocation2] sm:$0xff] 0.0
        %686 = vst [vmem:[#allocation2 + $0x8] sm:$0xff] 0.0
        %687 = vst [vmem:[#allocation3] sm:$0xff] 0.0
        %688 = vst [vmem:[#allocation3 + $0x8] sm:$0xff] 0.0
        %vm689 = vcmask 130048
        %690 = vst.msk [vmem:[#allocation2] sm:$0xff] %vm689, %v683
        %691 = vst.msk [vmem:[#allocation3] sm:$0xff] %vm689, %v684
        %v692 = vld [vmem:[%s571] sm:$0x3]
        %s693 = scalar_select %p682, 1, 0
        %v694 = vstv %s693
        %vm695 = vcmp.eq.s32.totalorder %v694, 1
        %v696 = vsel %vm695, 0.0, %v692
        %vm697 = vcmask 123904
        %698 = vst.msk [vmem:[#allocation2 + $0x8] sm:$0x3] %vm697, %v696
        %v699 = vld [vmem:[%s589] sm:$0x3]
        %v700 = vsel %vm695, 0.0, %v699
        %701 = vst.msk [vmem:[#allocation3 + $0x8] sm:$0x3] %vm697, %v700
        %v702 = vld [vmem:[%s562 + $0x6] sm:$0x3]
        %s703 = scalar_select %p681, 1, 0
        %v704 = vstv %s703
        %vm705 = vcmp.eq.s32.totalorder %v704, 1
        %v706 = vsel %vm705, 0.0, %v702
        %707 = vst.msk [vmem:[#allocation2 + $0xe] sm:$0x3] %vm697, %v706
        %v708 = vld [vmem:[%s580 + $0x6] sm:$0x3]
        %v709 = vsel %vm705, 0.0, %v708
        %710 = vst.msk [vmem:[#allocation3 + $0xe] sm:$0x3] %vm697, %v709
        %vm711 = vcmp.gt.f32.partialorder %v684, 0.0
        %v712 = vsel %vm711, 1, 0
        %v713 = vcvt.s32.f32 %v712
        %v714 = vsub.f32 %v683, %v684
        %v715 = vand.u32 2147483647, %v714
        %v716 = vmul.f32 %v715, %v713
        %vm717 = vcmp.lt.f32.partialorder %v716, 1.0
        %v718 = vmul.f32 %v716, 0.5
        %v719 = vmul.f32 %v718, %v716
        %v720 = vsub.f32 %v716, 0.5
        %v721 = vsel %vm717, %v719, %v720
        %v722 = vsel %vm689, %v721, 0.0
        %723 = vadd.xlane.f32.xlu0 %v722
        %v724 = vpop.xlane.xlu0 %723
        %v725 = vrot.slane %v724, 4
        %v726 = vadd.f32 %v724, %v725
        %v727 = vrot.slane %v726, 2
        %v728 = vadd.f32 %v726, %v727
        %v729 = vrot.slane %v728, 1
        %v730 = vadd.f32 %v728, %v729
        %s731 = vtos %v730
        %v732 = vsel %vm689, %v713, 0.0
        %733 = vadd.xlane.f32.xlu0 %v732
        %v734 = vpop.xlane.xlu0 %733
        %v735 = vrot.slane %v734, 4
        %v736 = vadd.f32 %v734, %v735
        %v737 = vrot.slane %v736, 2
        %v738 = vadd.f32 %v736, %v737
        %v739 = vrot.slane %v738, 1
        %v740 = vadd.f32 %v738, %v739
        %s741 = vtos %v740
        %v742 = vld [vmem:[#allocation2] sm:$0xff]
        %v743 = vld [vmem:[#allocation2 + $0x8] sm:$0xff]
        %v744 = vld [vmem:[#allocation3] sm:$0xff]
        %v745 = vld [vmem:[#allocation3 + $0x8] sm:$0xff]
        %vm746 = vcmp.gt.f32.partialorder %v744, 0.0
        %vm747 = vcmp.gt.f32.partialorder %v745, 0.0
        %v748 = vsel %vm746, 1, 0
        %v749 = vsel %vm747, 1, 0
        %v750 = vcvt.s32.f32 %v748
        %v751 = vcvt.s32.f32 %v749
        %v752 = vmul.f32 %v742, %v750
        %v753 = vmul.f32 %v743, %v751
        %v754 = vmul.f32 %v744, %v750
        %v755 = vmul.f32 %v745, %v751
        %v756 = vmul.f32 %v752, 0.2920817
        %v757 = vmul.f32 %v753, 0.2920817
        %v758 = vrot.slane %v752, 7
        %v759 = vrot.slane %v753, 7
        %v760 = vlaneseq
        %v761 = vshrl.u32 %v760, 7
        %vm762 = vcmp.lt.s32.totalorder %v761, 1
        %v763 = vsel %vm762, %v758, %v759
        %v764 = vsel %vm762, %v759, %v758
        %v765 = vrot.slane %v752, 1
        %v766 = vrot.slane %v753, 1
        %vm767 = vcmp.lt.s32.totalorder %v761, 7
        %v768 = vsel %vm767, %v765, %v766
        %v769 = vsel %vm767, %v766, %v765
        %v770 = vadd.f32 %v764, %v768
        %v771 = vadd.f32 %v763, %v769
        %v772 = vmul.f32 %v770, 0.23388076
        %v773 = vmul.f32 %v771, 0.23388076
        %v774 = vadd.f32 %v756, %v772
        %v775 = vadd.f32 %v757, %v773
        %v776 = vrot.slane %v752, 6
        %v777 = vrot.slane %v753, 6
        %vm778 = vcmp.lt.s32.totalorder %v761, 2
        %v779 = vsel %vm778, %v776, %v777
        %v780 = vsel %vm778, %v777, %v776
        %v781 = vrot.slane %v752, 2
        %v782 = vrot.slane %v753, 2
        %vm783 = vcmp.lt.s32.totalorder %v761, 6
        %v784 = vsel %vm783, %v781, %v782
        %v785 = vsel %vm783, %v782, %v781
        %v786 = vadd.f32 %v780, %v784
        %v787 = vadd.f32 %v779, %v785
        %v788 = vmul.f32 %v786, 0.120078385
        %v789 = vmul.f32 %v787, 0.120078385
        %v790 = vadd.f32 %v774, %v788
        %v791 = vadd.f32 %v775, %v789
        %v792 = vmul.f32 %v790, 0.2920817
        %v793 = vmul.f32 %v791, 0.2920817
        %794 = vrot.lane.b32.xlu0 %v790, 1
        %v795 = vpop.permute.xlu0 %794
        %796 = vrot.lane.b32.xlu0 %v791, 1
        %v797 = vpop.permute.xlu0 %796
        %798 = vrot.lane.b32.xlu0 %v790, 127
        %v799 = vpop.permute.xlu0 %798
        %800 = vrot.lane.b32.xlu0 %v791, 127
        %v801 = vpop.permute.xlu0 %800
        %v802 = vadd.f32 %v795, %v799
        %v803 = vadd.f32 %v797, %v801
        %v804 = vmul.f32 %v802, 0.23388076
        %v805 = vmul.f32 %v803, 0.23388076
        %v806 = vadd.f32 %v792, %v804
        %v807 = vadd.f32 %v793, %v805
        %808 = vrot.lane.b32.xlu0 %v790, 2
        %v809 = vpop.permute.xlu0 %808
        %810 = vrot.lane.b32.xlu0 %v791, 2
        %v811 = vpop.permute.xlu0 %810
        %812 = vrot.lane.b32.xlu0 %v790, 126
        %v813 = vpop.permute.xlu0 %812
        %814 = vrot.lane.b32.xlu0 %v791, 126
        %v815 = vpop.permute.xlu0 %814
        %v816 = vadd.f32 %v809, %v813
        %v817 = vadd.f32 %v811, %v815
        %v818 = vmul.f32 %v816, 0.120078385
        %v819 = vmul.f32 %v817, 0.120078385
        %v820 = vadd.f32 %v806, %v818
        %v821 = vadd.f32 %v807, %v819
        %v822 = vmul.f32 %v754, 0.2920817
        %v823 = vmul.f32 %v755, 0.2920817
        %v824 = vrot.slane %v754, 7
        %v825 = vrot.slane %v755, 7
        %v826 = vsel %vm762, %v824, %v825
        %v827 = vsel %vm762, %v825, %v824
        %v828 = vrot.slane %v754, 1
        %v829 = vrot.slane %v755, 1
        %v830 = vsel %vm767, %v828, %v829
        %v831 = vsel %vm767, %v829, %v828
        %v832 = vadd.f32 %v827, %v830
        %v833 = vadd.f32 %v826, %v831
        %v834 = vmul.f32 %v832, 0.23388076
        %v835 = vmul.f32 %v833, 0.23388076
        %v836 = vadd.f32 %v822, %v834
        %v837 = vadd.f32 %v823, %v835
        %v838 = vrot.slane %v754, 6
        %v839 = vrot.slane %v755, 6
        %v840 = vsel %vm778, %v838, %v839
        %v841 = vsel %vm778, %v839, %v838
        %v842 = vrot.slane %v754, 2
        %v843 = vrot.slane %v755, 2
        %v844 = vsel %vm783, %v842, %v843
        %v845 = vsel %vm783, %v843, %v842
        %v846 = vadd.f32 %v841, %v844
        %v847 = vadd.f32 %v840, %v845
        %v848 = vmul.f32 %v846, 0.120078385
        %v849 = vmul.f32 %v847, 0.120078385
        %v850 = vadd.f32 %v836, %v848
        %v851 = vadd.f32 %v837, %v849
        %v852 = vmul.f32 %v850, 0.2920817
        %v853 = vmul.f32 %v851, 0.2920817
        %854 = vrot.lane.b32.xlu0 %v850, 1
        %v855 = vpop.permute.xlu0 %854
        %856 = vrot.lane.b32.xlu0 %v851, 1
        %v857 = vpop.permute.xlu0 %856
        %858 = vrot.lane.b32.xlu0 %v850, 127
        %v859 = vpop.permute.xlu0 %858
        %860 = vrot.lane.b32.xlu0 %v851, 127
        %v861 = vpop.permute.xlu0 %860
        %v862 = vadd.f32 %v855, %v859
        %v863 = vadd.f32 %v857, %v861
        %v864 = vmul.f32 %v862, 0.23388076
        %v865 = vmul.f32 %v863, 0.23388076
        %v866 = vadd.f32 %v852, %v864
        %v867 = vadd.f32 %v853, %v865
        %868 = vrot.lane.b32.xlu0 %v850, 2
        %v869 = vpop.permute.xlu0 %868
        %870 = vrot.lane.b32.xlu0 %v851, 2
        %v871 = vpop.permute.xlu0 %870
        %872 = vrot.lane.b32.xlu0 %v850, 126
        %v873 = vpop.permute.xlu0 %872
        %874 = vrot.lane.b32.xlu0 %v851, 126
        %v875 = vpop.permute.xlu0 %874
        %v876 = vadd.f32 %v869, %v873
        %v877 = vadd.f32 %v871, %v875
        %v878 = vmul.f32 %v876, 0.120078385
        %v879 = vmul.f32 %v877, 0.120078385
        %v880 = vadd.f32 %v866, %v878
        %v881 = vadd.f32 %v867, %v879
        %v882 = vmul.f32 %v820, %v880
        %v883 = vmul.f32 %v821, %v881
        %v884 = vmul.f32 %v820, %v820
        %v885 = vmul.f32 %v821, %v821
        %v886 = vmul.f32 %v880, %v880
        %v887 = vmul.f32 %v881, %v881
        %v888 = vadd.f32 %v884, %v886
        %v889 = vadd.f32 %v885, %v887
        %v890 = vmul.f32 %v882, 2.0
        %v891 = vmul.f32 %v883, 2.0
        %v892 = vadd.f32 %v890, 0.0001
        %v893 = vadd.f32 %v891, 0.0001
        %v894 = vmul.f32 %v752, %v754
        %v895 = vmul.f32 %v753, %v755
        %v896 = vmul.f32 %v894, 0.2920817
        %v897 = vmul.f32 %v895, 0.2920817
        %v898 = vrot.slane %v894, 7
        %v899 = vrot.slane %v895, 7
        %v900 = vsel %vm762, %v898, %v899
        %v901 = vsel %vm762, %v899, %v898
        %v902 = vrot.slane %v894, 1
        %v903 = vrot.slane %v895, 1
        %v904 = vsel %vm767, %v902, %v903
        %v905 = vsel %vm767, %v903, %v902
        %v906 = vadd.f32 %v901, %v904
        %v907 = vadd.f32 %v900, %v905
        %v908 = vmul.f32 %v906, 0.23388076
        %v909 = vmul.f32 %v907, 0.23388076
        %v910 = vadd.f32 %v896, %v908
        %v911 = vadd.f32 %v897, %v909
        %v912 = vrot.slane %v894, 6
        %v913 = vrot.slane %v895, 6
        %v914 = vsel %vm778, %v912, %v913
        %v915 = vsel %vm778, %v913, %v912
        %v916 = vrot.slane %v894, 2
        %v917 = vrot.slane %v895, 2
        %v918 = vsel %vm783, %v916, %v917
        %v919 = vsel %vm783, %v917, %v916
        %v920 = vadd.f32 %v915, %v918
        %v921 = vadd.f32 %v914, %v919
        %v922 = vmul.f32 %v920, 0.120078385
        %v923 = vmul.f32 %v921, 0.120078385
        %v924 = vadd.f32 %v910, %v922
        %v925 = vadd.f32 %v911, %v923
        %v926 = vmul.f32 %v924, 0.2920817
        %v927 = vmul.f32 %v925, 0.2920817
        %928 = vrot.lane.b32.xlu0 %v924, 1
        %v929 = vpop.permute.xlu0 %928
        %930 = vrot.lane.b32.xlu0 %v925, 1
        %v931 = vpop.permute.xlu0 %930
        %932 = vrot.lane.b32.xlu0 %v924, 127
        %v933 = vpop.permute.xlu0 %932
        %934 = vrot.lane.b32.xlu0 %v925, 127
        %v935 = vpop.permute.xlu0 %934
        %v936 = vadd.f32 %v929, %v933
        %v937 = vadd.f32 %v931, %v935
        %v938 = vmul.f32 %v936, 0.23388076
        %v939 = vmul.f32 %v937, 0.23388076
        %v940 = vadd.f32 %v926, %v938
        %v941 = vadd.f32 %v927, %v939
        %942 = vrot.lane.b32.xlu0 %v924, 2
        %v943 = vpop.permute.xlu0 %942
        %944 = vrot.lane.b32.xlu0 %v925, 2
        %v945 = vpop.permute.xlu0 %944
        %946 = vrot.lane.b32.xlu0 %v924, 126
        %v947 = vpop.permute.xlu0 %946
        %948 = vrot.lane.b32.xlu0 %v925, 126
        %v949 = vpop.permute.xlu0 %948
        %v950 = vadd.f32 %v943, %v947
        %v951 = vadd.f32 %v945, %v949
        %v952 = vmul.f32 %v950, 0.120078385
        %v953 = vmul.f32 %v951, 0.120078385
        %v954 = vadd.f32 %v940, %v952
        %v955 = vadd.f32 %v941, %v953
        %v956 = vsub.f32 %v954, %v882
        %v957 = vsub.f32 %v955, %v883
        %v958 = vmul.f32 %v956, 2.0
        %v959 = vmul.f32 %v957, 2.0
        %v960 = vadd.f32 %v958, 0.0009
        %v961 = vadd.f32 %v959, 0.0009
        %v962 = vmul.f32 %v892, %v960
        %v963 = vmul.f32 %v893, %v961
        %v964 = vadd.f32 %v888, 0.0001
        %v965 = vadd.f32 %v889, 0.0001
        %v966 = vmul.f32 %v752, %v752
        %v967 = vmul.f32 %v753, %v753
        %v968 = vmul.f32 %v966, 0.2920817
        %v969 = vmul.f32 %v967, 0.2920817
        %v970 = vrot.slane %v966, 7
        %v971 = vrot.slane %v967, 7
        %v972 = vsel %vm762, %v970, %v971
        %v973 = vsel %vm762, %v971, %v970
        %v974 = vrot.slane %v966, 1
        %v975 = vrot.slane %v967, 1
        %v976 = vsel %vm767, %v974, %v975
        %v977 = vsel %vm767, %v975, %v974
        %v978 = vadd.f32 %v973, %v976
        %v979 = vadd.f32 %v972, %v977
        %v980 = vmul.f32 %v978, 0.23388076
        %v981 = vmul.f32 %v979, 0.23388076
        %v982 = vadd.f32 %v968, %v980
        %v983 = vadd.f32 %v969, %v981
        %v984 = vrot.slane %v966, 6
        %v985 = vrot.slane %v967, 6
        %v986 = vsel %vm778, %v984, %v985
        %v987 = vsel %vm778, %v985, %v984
        %v988 = vrot.slane %v966, 2
        %v989 = vrot.slane %v967, 2
        %v990 = vsel %vm783, %v988, %v989
        %v991 = vsel %vm783, %v989, %v988
        %v992 = vadd.f32 %v987, %v990
        %v993 = vadd.f32 %v986, %v991
        %v994 = vmul.f32 %v992, 0.120078385
        %v995 = vmul.f32 %v993, 0.120078385
        %v996 = vadd.f32 %v982, %v994
        %v997 = vadd.f32 %v983, %v995
        %v998 = vmul.f32 %v996, 0.2920817
        %v999 = vmul.f32 %v997, 0.2920817
        %1000 = vrot.lane.b32.xlu0 %v996, 1
        %v1001 = vpop.permute.xlu0 %1000
        %1002 = vrot.lane.b32.xlu0 %v997, 1
        %v1003 = vpop.permute.xlu0 %1002
        %1004 = vrot.lane.b32.xlu0 %v996, 127
        %v1005 = vpop.permute.xlu0 %1004
        %1006 = vrot.lane.b32.xlu0 %v997, 127
        %v1007 = vpop.permute.xlu0 %1006
        %v1008 = vadd.f32 %v1001, %v1005
        %v1009 = vadd.f32 %v1003, %v1007
        %v1010 = vmul.f32 %v1008, 0.23388076
        %v1011 = vmul.f32 %v1009, 0.23388076
        %v1012 = vadd.f32 %v998, %v1010
        %v1013 = vadd.f32 %v999, %v1011
        %1014 = vrot.lane.b32.xlu0 %v996, 2
        %v1015 = vpop.permute.xlu0 %1014
        %1016 = vrot.lane.b32.xlu0 %v997, 2
        %v1017 = vpop.permute.xlu0 %1016
        %1018 = vrot.lane.b32.xlu0 %v996, 126
        %v1019 = vpop.permute.xlu0 %1018
        %1020 = vrot.lane.b32.xlu0 %v997, 126
        %v1021 = vpop.permute.xlu0 %1020
        %v1022 = vadd.f32 %v1015, %v1019
        %v1023 = vadd.f32 %v1017, %v1021
        %v1024 = vmul.f32 %v1022, 0.120078385
        %v1025 = vmul.f32 %v1023, 0.120078385
        %v1026 = vadd.f32 %v1012, %v1024
        %v1027 = vadd.f32 %v1013, %v1025
        %v1028 = vmul.f32 %v754, %v754
        %v1029 = vmul.f32 %v755, %v755
        %v1030 = vmul.f32 %v1028, 0.2920817
        %v1031 = vmul.f32 %v1029, 0.2920817
        %v1032 = vrot.slane %v1028, 7
        %v1033 = vrot.slane %v1029, 7
        %v1034 = vsel %vm762, %v1032, %v1033
        %v1035 = vsel %vm762, %v1033, %v1032
        %v1036 = vrot.slane %v1028, 1
        %v1037 = vrot.slane %v1029, 1
        %v1038 = vsel %vm767, %v1036, %v1037
        %v1039 = vsel %vm767, %v1037, %v1036
        %v1040 = vadd.f32 %v1035, %v1038
        %v1041 = vadd.f32 %v1034, %v1039
        %v1042 = vmul.f32 %v1040, 0.23388076
        %v1043 = vmul.f32 %v1041, 0.23388076
        %v1044 = vadd.f32 %v1030, %v1042
        %v1045 = vadd.f32 %v1031, %v1043
        %v1046 = vrot.slane %v1028, 6
        %v1047 = vrot.slane %v1029, 6
        %v1048 = vsel %vm778, %v1046, %v1047
        %v1049 = vsel %vm778, %v1047, %v1046
        %v1050 = vrot.slane %v1028, 2
        %v1051 = vrot.slane %v1029, 2
        %v1052 = vsel %vm783, %v1050, %v1051
        %v1053 = vsel %vm783, %v1051, %v1050
        %v1054 = vadd.f32 %v1049, %v1052
        %v1055 = vadd.f32 %v1048, %v1053
        %v1056 = vmul.f32 %v1054, 0.120078385
        %v1057 = vmul.f32 %v1055, 0.120078385
        %v1058 = vadd.f32 %v1044, %v1056
        %v1059 = vadd.f32 %v1045, %v1057
        %v1060 = vmul.f32 %v1058, 0.2920817
        %v1061 = vmul.f32 %v1059, 0.2920817
        %1062 = vrot.lane.b32.xlu0 %v1058, 1
        %v1063 = vpop.permute.xlu0 %1062
        %1064 = vrot.lane.b32.xlu0 %v1059, 1
        %v1065 = vpop.permute.xlu0 %1064
        %1066 = vrot.lane.b32.xlu0 %v1058, 127
        %v1067 = vpop.permute.xlu0 %1066
        %1068 = vrot.lane.b32.xlu0 %v1059, 127
        %v1069 = vpop.permute.xlu0 %1068
        %v1070 = vadd.f32 %v1063, %v1067
        %v1071 = vadd.f32 %v1065, %v1069
        %v1072 = vmul.f32 %v1070, 0.23388076
        %v1073 = vmul.f32 %v1071, 0.23388076
        %v1074 = vadd.f32 %v1060, %v1072
        %v1075 = vadd.f32 %v1061, %v1073
        %1076 = vrot.lane.b32.xlu0 %v1058, 2
        %v1077 = vpop.permute.xlu0 %1076
        %1078 = vrot.lane.b32.xlu0 %v1059, 2
        %v1079 = vpop.permute.xlu0 %1078
        %1080 = vrot.lane.b32.xlu0 %v1058, 126
        %v1081 = vpop.permute.xlu0 %1080
        %1082 = vrot.lane.b32.xlu0 %v1059, 126
        %v1083 = vpop.permute.xlu0 %1082
        %v1084 = vadd.f32 %v1077, %v1081
        %v1085 = vadd.f32 %v1079, %v1083
        %v1086 = vmul.f32 %v1084, 0.120078385
        %v1087 = vmul.f32 %v1085, 0.120078385
        %v1088 = vadd.f32 %v1074, %v1086
        %v1089 = vadd.f32 %v1075, %v1087
        %v1090 = vadd.f32 %v1026, %v1088
        %v1091 = vadd.f32 %v1027, %v1089
        %v1092 = vsub.f32 %v1090, %v888
        %v1093 = vsub.f32 %v1091, %v889
        %v1094 = vadd.f32 %v1092, 0.0009
        %v1095 = vadd.f32 %v1093, 0.0009
        %v1096 = vmul.f32 %v964, %v1094
        %v1097 = vmul.f32 %v965, %v1095
        %v1098 = vrcp.pop %v1096
        %v1099 = vmul.f32 %v962, %v1098
        %v1100 = vrcp.pop %v1097
        %v1101 = vmul.f32 %v963, %v1100
        %v1102 = vadd.s32 %v761, 8
        %v1103 = vlaneseq
        %v1104 = vand.u32 %v1103, 127
        %vm1105 = vcmp.lt.s32.totalorder %v761, 8
        %vm1106 = vcmp.lt.s32.totalorder %v1102, 8
        %vm1107 = vcmp.lt.s32.totalorder %v1104, 16
        %vm1108 = vmand %vm1105, %vm1107
        %vm1109 = vmand %vm1106, %vm1107
        %v1110 = vsel %vm1108, %v1099, 0.0
        %v1111 = vsel %vm1109, %v1101, 0.0
        %v1112 = vadd.f32 %v1110, %v1111
        %1113 = vadd.xlane.f32.xlu0 %v1112
        %v1114 = vpop.xlane.xlu0 %1113
        %v1115 = vrot.slane %v1114, 4
        %v1116 = vadd.f32 %v1114, %v1115
        %v1117 = vrot.slane %v1116, 2
        %v1118 = vadd.f32 %v1116, %v1117
        %v1119 = vrot.slane %v1118, 1
        %v1120 = vadd.f32 %v1118, %v1119
        %s1121 = vtos %v1120
        %v1122 = vld [vmem:[%s553] sm:$0xff]
        %v1123 = vld [vmem:[%s553 + $0x8] sm:$0xff]
        %v1124 = vld [vmem:[%s553 + $0x10] sm:$0xff]
        %1126 = vrot.lane.b32.xlu0 %v683, 127
        %v1127 = vpop.permute.xlu0 %1126
        %v1129 = vsub.f32 %v683, %v1127
        %v1130 = vand.u32 2147483647, %v1129
        %1132 = vrot.lane.b32.xlu0 %v1122, 127
        %v1133 = vpop.permute.xlu0 %1132
        %v1135 = vsub.f32 %v1122, %v1133
        %v1136 = vand.u32 2147483647, %v1135
        %1138 = vrot.lane.b32.xlu0 %v1123, 127
        %v1139 = vpop.permute.xlu0 %1138
        %v1141 = vsub.f32 %v1123, %v1139
        %v1142 = vand.u32 2147483647, %v1141
        %v1143 = vadd.f32 %v1136, %v1142
        %1145 = vrot.lane.b32.xlu0 %v1124, 127
        %v1146 = vpop.permute.xlu0 %1145
        %v1148 = vsub.f32 %v1124, %v1146
        %v1149 = vand.u32 2147483647, %v1148
        %v1150 = vadd.f32 %v1143, %v1149
        %v1151 = vmul.f32 %v1150, -3.3333333
        %v1152 = vmul.f32 %v1151, 1.442695
        %v1153 = vpow.pop %v1152
        %v1154 = vmul.f32 %v1130, %v1153
        %vm1155 = vcmask 121856
        %v1156 = vsel %vm1155, %v1154, 0.0
        %1157 = vadd.xlane.f32.xlu0 %v1156
        %v1158 = vpop.xlane.xlu0 %1157
        %v1159 = vrot.slane %v1158, 4
        %v1160 = vadd.f32 %v1158, %v1159
        %v1161 = vrot.slane %v1160, 2
        %v1162 = vadd.f32 %v1160, %v1161
        %v1163 = vrot.slane %v1162, 1
        %v1164 = vadd.f32 %v1162, %v1163
        %s1165 = vtos %v1164
        %v1166 = vrot.slane %v683, 1
        %v1168 = vsub.f32 %v683, %v1166
        %v1169 = vand.u32 2147483647, %v1168
        %v1170 = vrot.slane %v1122, 1
        %v1172 = vsub.f32 %v1122, %v1170
        %v1173 = vand.u32 2147483647, %v1172
        %v1174 = vrot.slane %v1123, 1
        %v1176 = vsub.f32 %v1123, %v1174
        %v1177 = vand.u32 2147483647, %v1176
        %v1178 = vadd.f32 %v1173, %v1177
        %v1179 = vrot.slane %v1124, 1
        %v1181 = vsub.f32 %v1124, %v1179
        %v1182 = vand.u32 2147483647, %v1181
        %v1183 = vadd.f32 %v1178, %v1182
        %v1184 = vmul.f32 %v1183, -3.3333333
        %v1185 = vmul.f32 %v1184, 1.442695
        %v1186 = vpow.pop %v1185
        %v1187 = vmul.f32 %v1169, %v1186
        %vm1188 = vcmask 129024
        %v1189 = vsel %vm1188, %v1187, 0.0
        %1190 = vadd.xlane.f32.xlu0 %v1189
        %v1191 = vpop.xlane.xlu0 %1190
        %v1192 = vrot.slane %v1191, 4
        %v1193 = vadd.f32 %v1191, %v1192
        %v1194 = vrot.slane %v1193, 2
        %v1195 = vadd.f32 %v1193, %v1194
        %v1196 = vrot.slane %v1195, 1
        %v1197 = vadd.f32 %v1195, %v1196
        %s1198 = vtos %v1197
        %v1199 = vld [vmem:[%s571] sm:$0x1]
        %v1201 = vrot.slane %v1199, 1
        %v1203 = vsub.f32 %v683, %v1201
        %v1204 = vand.u32 2147483647, %v1203
        %v1205 = vld [vmem:[%s598] sm:$0x1]
        %v1207 = vrot.slane %v1205, 1
        %v1209 = vsub.f32 %v1122, %v1207
        %v1210 = vand.u32 2147483647, %v1209
        %s1211 = scalar_lea.vmem %s598, 8 [#allocation16]
        %v1212 = vld [vmem:[%s1211] sm:$0x1]
        %v1214 = vrot.slane %v1212, 1
        %v1216 = vsub.f32 %v1123, %v1214
        %v1217 = vand.u32 2147483647, %v1216
        %v1218 = vadd.f32 %v1210, %v1217
        %s1219 = scalar_lea.vmem %s598, 16 [#allocation16]
        %v1220 = vld [vmem:[%s1219] sm:$0x1]
        %v1222 = vrot.slane %v1220, 1
        %v1224 = vsub.f32 %v1124, %v1222
        %v1225 = vand.u32 2147483647, %v1224
        %v1226 = vadd.f32 %v1218, %v1225
        %v1227 = vmul.f32 %v1226, -3.3333333
        %v1228 = vmul.f32 %v1227, 1.442695
        %v1229 = vpow.pop %v1228
        %v1230 = vmul.f32 %v1204, %v1229
        %v1232 = vrot.slane %v1230, 7
        %vm1234 = vcmask 122880
        %v1235 = vsel %vm1234, %v1232, 0.0
        %1236 = vadd.xlane.f32.xlu0 %v1235
        %v1237 = vpop.xlane.xlu0 %1236
        %v1238 = vrot.slane %v1237, 4
        %v1239 = vadd.f32 %v1237, %v1238
        %v1240 = vrot.slane %v1239, 2
        %v1241 = vadd.f32 %v1239, %v1240
        %v1242 = vrot.slane %v1241, 1
        %v1243 = vadd.f32 %v1241, %v1242
        %s1244 = vtos %v1243
        %s1245 = scalar_select %p682, 0.0, %s1244
        %s1246 = sadd.f32 %s1198, %s1245
        %vm1247 = vcmp.eq.s32.totalorder %v1104, 0
        %v1248 = vsel %vm1247, 1, 0
        %v1249 = vcvt.s32.f32 %v1248
        %v1250 = vstv %s731
        %v1251 = vmul.f32 %v1250, %v1249
        %vm1252 = vcmp.eq.s32.totalorder %v1104, 1
        %v1253 = vsel %vm1252, 1, 0
        %v1254 = vcvt.s32.f32 %v1253
        %v1255 = vstv %s741
        %v1256 = vmul.f32 %v1255, %v1254
        %v1257 = vadd.f32 %v1251, %v1256
        %vm1258 = vcmp.eq.s32.totalorder %v1104, 2
        %v1259 = vsel %vm1258, 1, 0
        %v1260 = vcvt.s32.f32 %v1259
        %v1261 = vstv %s1121
        %v1262 = vmul.f32 %v1261, %v1260
        %v1263 = vadd.f32 %v1257, %v1262
        %vm1264 = vcmp.eq.s32.totalorder %v1104, 3
        %v1265 = vsel %vm1264, 1, 0
        %v1266 = vcvt.s32.f32 %v1265
        %v1267 = vstv %s1165
        %v1268 = vmul.f32 %v1267, %v1266
        %v1269 = vadd.f32 %v1263, %v1268
        %vm1270 = vcmp.eq.s32.totalorder %v1104, 4
        %v1271 = vsel %vm1270, 1, 0
        %v1272 = vcvt.s32.f32 %v1271
        %v1273 = vstv %s1246
        %v1274 = vmul.f32 %v1273, %v1272
        %v1275 = vadd.f32 %v1269, %v1274
        %1276 = vst [vmem:[%s665] sm:$0xff] %v1275
        %s1277 = sand.u32 %s313, 1
        %s1278 = scalar_lea.sflag [#allocation6], %s1277
        %s1279 = sand.u32 %s313, 1
        %s1280 = smul.addr %s1279, 8
        %s1281 = scalar_lea.vmem [#allocation18], %s1280
        // Predicated region
        $region85: #{tpu_custom_call.1} parent=51 // pred_check
          %p1282 = pneg %p323
        $region86: #{tpu_custom_call.1} parent=51 // pred_check_branch
          %1284 = sbr.rel (%p1282) target = $region88
        $region87: #{tpu_custom_call.1} parent=51 // pred_region
          %s1286 = ssub.s32 128, 128
          %1287 = vsyncadd %s1278, %s1286
          %s1288 = smul.addr %s41, 2
          %s1289 = sadd.s32 %s42, %s1288
          %s1290 = smul.addr %s1289, 128
          %s1291 = scalar_lea.hbm %s8, %s1290
          %s1293 = sshll.u32 %s1281, 4
          %s1294 = int_to_ptr.vmem [resolvable:$true] %s1293
          %1296 = dma.vmem_to_hbm [thread:$0]  %s1294, 128, %s1291, %s1278
        $region88: #{tpu_custom_call.1} parent=51 // pred_fallthru
          _
      $region52: #{tpu_custom_call.1} parent=5 // pred_fallthru
        _
      %p1297 = scmp.le.s32.totalorder 2, %s32
      // Predicated region
      $region89: #{tpu_custom_call.1} parent=5 // pred_check
        %p1298 = pneg %p1297
      $region90: #{tpu_custom_call.1} parent=5 // pred_check_branch
        %1300 = sbr.rel (%p1298) target = $region92
      $region91: #{tpu_custom_call.1} parent=5 // pred_region
        %s1301 = ssub.s32 %s32, 2
        // Predicated region
        $region93: #{tpu_custom_call.1} parent=91 // pred_check
          %p1302 = pneg %p329
        $region94: #{tpu_custom_call.1} parent=91 // pred_check_branch
          %1304 = sbr.rel (%p1302) target = $region96
        $region95: #{tpu_custom_call.1} parent=91 // pred_region
          %s1305 = sand.u32 %s314, 1
          %s1306 = scalar_lea.sflag [#allocation6], %s1305
          %s1307 = sand.u32 %s314, 1
          %s1308 = smul.addr %s1307, 8
          %s1309 = scalar_lea.vmem [#allocation18], %s1308
          %1310 = dma.done %s1306, 128
        $region96: #{tpu_custom_call.1} parent=91 // pred_fallthru
          _
      $region92: #{tpu_custom_call.1} parent=5 // pred_fallthru
        _
    $region6: #{tpu_custom_call.1} parent=1 // loop_footer
      %s36 = sadd.s32 1, %s32
    $region7: #{tpu_custom_call.1} parent=1 // loop_footer_branch
      %31 = sbr.rel target = $region3
    $region8: #{tpu_custom_call.1} parent=1 // loop_exit
      _
    %1311 = vsyncpa [#allocation5], 1
    %s1312 = scalar_lea.sflag [#allocation5], 1
    %1313 = vsyncpa %s1312, 1
    %1314 = vsyncpa [#allocation8], 1
    %s1315 = scalar_lea.sflag [#allocation8], 1
    %1316 = vsyncpa %s1315, 1
    %1317 = vsyncpa [#allocation11], 1
    %s1318 = scalar_lea.sflag [#allocation11], 1
    %1319 = vsyncpa %s1318, 1
    %1320 = vsyncpa [#allocation14], 1
    %s1321 = scalar_lea.sflag [#allocation14], 1
    %1322 = vsyncpa %s1321, 1
    %1323 = vsyncpa [#allocation17], 1
    %s1324 = scalar_lea.sflag [#allocation17], 1
    %1325 = vsyncpa %s1324, 1
    %1326 = vsyncpa [#allocation6], 1
    %s1327 = scalar_lea.sflag [#allocation6], 1
    %1328 = vsyncpa %s1327, 1

</llo_original>
